<compile_context>
chip_gen: v7x
topology: tpu7x:2x2x1
jax: 0.10.0
libtpu: 0.0.40
codegen_flags: <defaults>
</compile_context>

<pallas_src>
import functools
import math

import jax
import jax.numpy as jnp
import numpy as np
from jax.experimental import pallas as pl
from jax.experimental.pallas import tpu as pltpu


_VMEM_LIMIT = 48 * 1024 * 1024  # leaves headroom on v7x's 64 MiB physical VMEM


# ----------------------------------------------------------------------------
# Tiled linear kernel (fused QKV projection and O projection)
# ----------------------------------------------------------------------------
def _linear_kernel(x_ref, w_ref, o_ref, acc_ref):
    @pl.when(pl.program_id(2) == 0)
    def _():
        acc_ref[...] = jnp.zeros_like(acc_ref)

    acc_ref[...] += jnp.dot(x_ref[...], w_ref[...],
                            preferred_element_type=jnp.float32)

    @pl.when(pl.program_id(2) == pl.num_programs(2) - 1)
    def _():
        o_ref[...] = acc_ref[...].astype(o_ref.dtype)


def _fit(dim, pref):
    """Preferred tile if it divides `dim`, else fall back to the full dim."""
    return pref if dim % pref == 0 else dim


def pallas_linear(x2d, w, *, tm=256, tn=256, tk=512):
    """y = x2d @ w with x2d:(M,K), w:(K,N); M/N/K tiled, f32 accumulation."""
    M, K = x2d.shape
    K2, N = w.shape
    assert K == K2
    tm, tn, tk = _fit(M, tm), _fit(N, tn), _fit(K, tk)
    grid = (M // tm, N // tn, K // tk)
    return pl.pallas_call(
        _linear_kernel,
        out_shape=jax.ShapeDtypeStruct((M, N), x2d.dtype),
        grid_spec=pltpu.PrefetchScalarGridSpec(
            num_scalar_prefetch=0,
            grid=grid,
            in_specs=[
                pl.BlockSpec((tm, tk), lambda i, j, k: (i, k)),
                pl.BlockSpec((tk, tn), lambda i, j, k: (k, j)),
            ],
            out_specs=pl.BlockSpec((tm, tn), lambda i, j, k: (i, j)),
            scratch_shapes=[pltpu.VMEM((tm, tn), jnp.float32)],
        ),
        compiler_params=pltpu.CompilerParams(
            dimension_semantics=("parallel", "parallel", "arbitrary"),
            vmem_limit_bytes=_VMEM_LIMIT),
    )(x2d, w)


# ----------------------------------------------------------------------------
# One-time probe of the strided lane-rotate (pltpu.roll) direction.
# ----------------------------------------------------------------------------
_ROLL_DIRECTION = None  # "normal" | "flipped" | "unsupported"


def _probe_strided_roll(t=128):
    """Empirically determine strided pltpu.roll semantics on this backend."""
    global _ROLL_DIRECTION
    if _ROLL_DIRECTION is not None:
        return _ROLL_DIRECTION

    def kern(x_ref, o_ref):
        mat = jnp.broadcast_to(x_ref[...], (t, t))
        o_ref[...] = pltpu.roll(mat, 1, 1, stride=1, stride_axis=0)

    try:
        x = jnp.arange(t, dtype=jnp.float32).reshape(1, t)
        out = pl.pallas_call(
            kern, out_shape=jax.ShapeDtypeStruct((t, t), jnp.float32))(x)
        out = np.asarray(jax.block_until_ready(out))
        base = np.arange(t, dtype=np.float32)
        normal = np.stack([np.roll(base, 1 + i) for i in range(t)])
        flipped = np.stack([np.roll(base, -(1 + i)) for i in range(t)])
        if np.array_equal(out, normal):
            _ROLL_DIRECTION = "normal"
        elif np.array_equal(out, flipped):
            _ROLL_DIRECTION = "flipped"
        else:
            _ROLL_DIRECTION = "unsupported"
    except Exception:
        _ROLL_DIRECTION = "unsupported"
    return _ROLL_DIRECTION


# ----------------------------------------------------------------------------
# Flash attention kernel: all heads per grid step, online softmax, T5 bias.
# q/k/v are read directly from the fused QKV projection output (B, S, 3*H*D)
# via three BlockSpecs over the same array -> no slicing / no transposes.
#
# Bias (bias_mode == "roll"): per step only two (H, tile) diagonal rows of the
# compressed bias are DMA'd; the (tq, tk) Toeplitz tile
#     bias[i, j] = virt[d*tile + (tile - 1 + j - i)]
# is rebuilt on-chip: lower band (j <= i) from diagonal row d, upper band from
# row d+1, each via a per-sublane-strided lane rotation on the XLU.
# ----------------------------------------------------------------------------
def _attn_step(q_ref, k_ref, v_ref, bias_refs, o_ref, m_sc, l_sc, acc_sc, *,
               n_heads, d_head, sm_scale, causal, tq, tk,
               bias_mode, roll_shift, roll_stride):
    ki = pl.program_id(2)

    @pl.when(ki == 0)
    def _():
        m_sc[...] = jnp.full_like(m_sc, -1e30)
        l_sc[...] = jnp.zeros_like(l_sc)
        acc_sc[...] = jnp.zeros_like(acc_sc)

    def process_block():
        if causal:
            row = pl.program_id(1) * tq + jax.lax.broadcasted_iota(
                jnp.int32, (tq, tk), 0)
            col = ki * tk + jax.lax.broadcasted_iota(jnp.int32, (tq, tk), 1)
            valid = col <= row

        if bias_mode == "roll":
            lo_rows = bias_refs[0][0].astype(jnp.float32)   # (H, tk)
            hi_rows = bias_refs[1][0].astype(jnp.float32)   # (H, tk)
            i_in = jax.lax.broadcasted_iota(jnp.int32, (tq, tk), 0)
            j_in = jax.lax.broadcasted_iota(jnp.int32, (tq, tk), 1)
            lower_band = j_in <= i_in

        # Read running stats once; write them back once (lane-dense stores).
        m_prev_all = m_sc[...]          # (tq, H)
        l_prev_all = l_sc[...]          # (tq, H)
        acc_prev = acc_sc[...]          # (tq, H*D)

        m_cols, l_cols, acc_cols = [], [], []
        for h in range(n_heads):                      # unrolled over heads
            lo, hi = h * d_head, (h + 1) * d_head
            qh = q_ref[0, :, lo:hi]                   # (tq, d_head)
            kh = k_ref[0, :, lo:hi]                   # (tk, d_head)
            vh = v_ref[0, :, lo:hi]                   # (tk, d_head)

            # q @ k^T without materializing a transpose.
            s = jax.lax.dot_general(
                qh, kh, (((1,), (1,)), ((), ())),
                preferred_element_type=jnp.float32)   # (tq, tk) f32
            if sm_scale != 1.0:                       # T5 uses 1.0 -> skipped
                s = s * sm_scale

            if bias_mode == "roll":
                lo_mat = jnp.broadcast_to(lo_rows[h:h + 1, :], (tq, tk))
                hi_mat = jnp.broadcast_to(hi_rows[h:h + 1, :], (tq, tk))
                lo_mat = pltpu.roll(lo_mat, roll_shift, 1,
                                    stride=roll_stride, stride_axis=0)
                hi_mat = pltpu.roll(hi_mat, roll_shift, 1,
                                    stride=roll_stride, stride_axis=0)
                s = s + jnp.where(lower_band, lo_mat, hi_mat)
            else:   # "slab": dense per-block-diagonal bias tile from HBM
                s = s + bias_refs[0][0, h].astype(jnp.float32)

            if causal:
                s = jnp.where(valid, s, -1e30)

            m_prev = m_prev_all[:, h:h + 1]
            m_new = jnp.maximum(m_prev, jnp.max(s, axis=-1, keepdims=True))
            alpha = jnp.exp(m_prev - m_new)
            p = jnp.exp(s - m_new)
            l_cols.append(alpha * l_prev_all[:, h:h + 1]
                          + jnp.sum(p, axis=-1, keepdims=True))
            acc_cols.append(alpha * acc_prev[:, lo:hi]
                            + jnp.dot(p.astype(vh.dtype), vh,
                                      preferred_element_type=jnp.float32))
            m_cols.append(m_new)

        m_sc[...] = jnp.concatenate(m_cols, axis=1)
        l_sc[...] = jnp.concatenate(l_cols, axis=1)
        acc_sc[...] = jnp.concatenate(acc_cols, axis=1)

    if causal:
        # Skip kv blocks that lie entirely above the diagonal.
        @pl.when(ki * tk <= pl.program_id(1) * tq + (tq - 1))
        def _():
            process_block()
    else:
        process_block()

    @pl.when(ki == pl.num_programs(2) - 1)
    def _():
        inv_l = pl.reciprocal(l_sc[...], approx=False)    # (tq, H)
        acc = acc_sc[...]
        out_cols = [acc[:, h * d_head:(h + 1) * d_head] * inv_l[:, h:h + 1]
                    for h in range(n_heads)]
        o_ref[0] = jnp.concatenate(out_cols, axis=1).astype(o_ref.dtype)


def flash_attention_fused_qkv(qkv, bias_arr, *, n_heads, d_head,
                              sm_scale=1.0, causal=False, tq=128, tk=128,
                              bias_mode="roll", roll_params=(1, 1)):
    """qkv: (B, S, 3*H*D) fused projection output (q | k | v on the last dim).
    bias_arr: (nq+nk, H, tk) diagonal rows ("roll") or
              (nq+nk-1, H, tq, tk) dense slabs ("slab").
    Returns (B, S, H*D)."""
    B, S, three_inner = qkv.shape
    inner = n_heads * d_head
    assert three_inner == 3 * inner
    assert inner % 128 == 0, "head fusion needs n_heads*d_kv % 128 == 0"
    # TODO(synk): no padding/masking path for S not a multiple of the tile.
    assert S % tq == 0 and S % tk == 0 and tq == tk
    nq, nk = S // tq, S // tk

    roll_shift, roll_stride = roll_params
    body = functools.partial(
        _attn_step, n_heads=n_heads, d_head=d_head, sm_scale=sm_scale,
        causal=causal, tq=tq, tk=tk, bias_mode=bias_mode,
        roll_shift=roll_shift, roll_stride=roll_stride)

    q_spec = pl.BlockSpec((1, tq, inner), lambda b, qi, ki: (b, qi, 0))
    k_spec = pl.BlockSpec((1, tk, inner), lambda b, qi, ki: (b, ki, 1))
    v_spec = pl.BlockSpec((1, tk, inner), lambda b, qi, ki: (b, ki, 2))

    if bias_mode == "roll":
        assert bias_arr.shape == (nq + nk, n_heads, tk)
        bias_specs = [
            pl.BlockSpec((1, n_heads, tk),
                         lambda b, qi, ki: (ki - qi + nq - 1, 0, 0)),
            pl.BlockSpec((1, n_heads, tk),
                         lambda b, qi, ki: (ki - qi + nq, 0, 0)),
        ]
        bias_operands = (bias_arr, bias_arr)

        def kernel(q_ref, k_ref, v_ref, b1, b2, o_ref, m_sc, l_sc, acc_sc):
            body(q_ref, k_ref, v_ref, (b1, b2), o_ref, m_sc, l_sc, acc_sc)
    else:
        assert bias_arr.shape == (nq + nk - 1, n_heads, tq, tk)
        bias_specs = [
            pl.BlockSpec((1, n_heads, tq, tk),
                         lambda b, qi, ki: (ki - qi + nq - 1, 0, 0, 0)),
        ]
        bias_operands = (bias_arr,)

        def kernel(q_ref, k_ref, v_ref, b1, o_ref, m_sc, l_sc, acc_sc):
            body(q_ref, k_ref, v_ref, (b1,), o_ref, m_sc, l_sc, acc_sc)

    return pl.pallas_call(
        kernel,
        out_shape=jax.ShapeDtypeStruct((B, S, inner), qkv.dtype),
        grid_spec=pltpu.PrefetchScalarGridSpec(
            num_scalar_prefetch=0,
            grid=(B, nq, nk),
            in_specs=[q_spec, k_spec, v_spec] + bias_specs,
            out_specs=pl.BlockSpec((1, tq, inner),
                                   lambda b, qi, ki: (b, qi, 0)),
            scratch_shapes=[
                pltpu.VMEM((tq, n_heads), jnp.float32),   # running max
                pltpu.VMEM((tq, n_heads), jnp.float32),   # running denom
                pltpu.VMEM((tq, inner), jnp.float32),     # running numerator
            ],
        ),
        compiler_params=pltpu.CompilerParams(
            dimension_semantics=("parallel", "parallel", "arbitrary"),
            vmem_limit_bytes=_VMEM_LIMIT),
    )(qkv, qkv, qkv, *bias_operands)


# ----------------------------------------------------------------------------
# T5 relative-position bias (V7 compressed "virtual position" form)
# ----------------------------------------------------------------------------
def _relative_position_bucket(relative_position, bidirectional=True,
                              num_buckets=32, max_distance=128):
    relative_buckets = jnp.zeros_like(relative_position)
    if bidirectional:
        num_buckets //= 2
        relative_buckets = relative_buckets + (
            relative_position > 0).astype(jnp.int32) * num_buckets
        relative_position = jnp.abs(relative_position)
    else:
        relative_position = -jnp.minimum(
            relative_position, jnp.zeros_like(relative_position))
    max_exact = num_buckets // 2
    is_small = relative_position < max_exact
    rel_if_large = max_exact + (
        jnp.log(relative_position.astype(jnp.float32) / max_exact)
        / math.log(max_distance / max_exact)
        * (num_buckets - max_exact)
    ).astype(jnp.int32)
    rel_if_large = jnp.minimum(rel_if_large, num_buckets - 1)
    relative_buckets = relative_buckets + jnp.where(
        is_small, relative_position, rel_if_large)
    return relative_buckets


def compute_bias_v7(query_length, key_length, rel_bias_weight,
                    bidirectional, num_buckets, max_distance):
    """Compressed bias: (1, H, query_length + key_length - 1)."""
    virtual_position = jnp.arange(-query_length + 1, key_length, dtype=jnp.int32)
    buckets = _relative_position_bucket(
        virtual_position, bidirectional=bidirectional,
        num_buckets=num_buckets, max_distance=max_distance)
    virt_values = rel_bias_weight[buckets]                 # (L, H)
    return jnp.transpose(virt_values, (1, 0))[None]        # (1, H, L)


def expand_virtual_bias(virt_values, query_length, key_length):
    """Dense (1, H, Sq, Sk) expansion — used only by the pure-JAX reference."""
    ctx = jnp.arange(query_length)[:, None]
    mem = jnp.arange(key_length)[None, :]
    idx = mem - ctx + query_length - 1
    return virt_values[:, :, idx]


def compressed_bias_to_diag_rows(virt_values, query_length, key_length, tile):
    """(1, H, Sq+Sk-1) -> (nq+nk, H, tile) with rows[d, h, m] = virt[h, d*tile+m]."""
    one, H, L = virt_values.shape
    assert one == 1 and L == query_length + key_length - 1
    assert query_length % tile == 0 and key_length % tile == 0
    n_rows = (query_length + key_length) // tile
    pad = n_rows * tile - L                        # == 1 (never read by kernel)
    v = jnp.pad(virt_values[0], ((0, 0), (0, pad)))
    v = v.reshape(H, n_rows, tile)
    return jnp.transpose(v, (1, 0, 2))


def expand_bias_block_diagonal(virt_values, query_length, key_length, tile):
    """Fallback path: one (tile, tile) dense bias slab per block diagonal."""
    nq, nk = query_length // tile, key_length // tile
    n_diag = nq + nk - 1
    i = jnp.arange(tile)[:, None]
    j = jnp.arange(tile)[None, :]
    base = (jnp.arange(n_diag) - (nq - 1)) * tile + (query_length - 1)
    idx = base[:, None, None] + (j - i)[None]              # (n_diag, t, t)
    out = virt_values[0][:, idx]                           # (H, n_diag, t, t)
    return jnp.transpose(out, (1, 0, 2, 3))                # (n_diag, H, t, t)


# ----------------------------------------------------------------------------
# Module wrapper
# ----------------------------------------------------------------------------
class FlashT5AttentionV7Pallas:
    def __init__(self, *, d_model, d_kv, num_heads,
                 relative_attention_num_buckets=32,
                 relative_attention_max_distance=128,
                 has_relative_attention_bias=True,
                 is_decoder=False, is_causal=False,
                 key=None, dtype=jnp.float32, tq=128, tk=128):
        self.d_model = d_model
        self.key_value_proj_dim = d_kv
        self.n_heads = num_heads
        self.inner_dim = num_heads * d_kv
        self.num_buckets = relative_attention_num_buckets
        self.max_distance = relative_attention_max_distance
        self.has_relative_attention_bias = has_relative_attention_bias
        self.is_decoder = is_decoder
        self.is_causal = is_causal
        self.dtype = dtype
        assert tq == tk  # block-diagonal bias handling assumes square tiles
        self.tq, self.tk = tq, tk

        direction = _probe_strided_roll(tk)
        if direction == "normal":
            self.bias_mode, self.roll_params = "roll", (1, 1)
        elif direction == "flipped":
            self.bias_mode, self.roll_params = "roll", (tk - 1, tk - 1)
        else:
            # TODO(synk): strided pltpu.roll unavailable on this backend ->
            # fall back to per-block-diagonal dense bias slabs (more DMA).
            self.bias_mode, self.roll_params = "slab", (0, 1)

        if key is None:
            key = jax.random.PRNGKey(0)
        kq, kk, kv, ko, kb = jax.random.split(key, 5)
        s = 0.05
        wq = s * jax.random.normal(kq, (d_model, self.inner_dim))
        wk = s * jax.random.normal(kk, (d_model, self.inner_dim))
        wv = s * jax.random.normal(kv, (d_model, self.inner_dim))
        # fused QKV weight -> one projection pass over the activations
        self.w_qkv = jnp.concatenate([wq, wk, wv], axis=1).astype(dtype)
        self.wo = (s * jax.random.normal(
            ko, (self.inner_dim, d_model))).astype(dtype)
        if has_relative_attention_bias:
            self.rel_bias = (s * jax.random.normal(
                kb, (relative_attention_num_buckets, num_heads))).astype(dtype)

    def __call__(self, hidden_states, position_bias=None):
        B, S, _ = hidden_states.shape
        x2d = hidden_states.reshape(B * S, self.d_model)

        # Single fused QKV projection: one HBM pass over x, one kernel launch.
        qkv = pallas_linear(x2d, self.w_qkv).reshape(B, S, 3 * self.inner_dim)

        if position_bias is None:
            if not self.has_relative_attention_bias:
                position_bias = jnp.zeros((1, self.n_heads, 2 * S - 1),
                                          qkv.dtype)
            else:
                position_bias = compute_bias_v7(
                    S, S, self.rel_bias,
                    bidirectional=not self.is_decoder,
                    num_buckets=self.num_buckets,
                    max_distance=self.max_distance)

        if self.bias_mode == "roll":
            # Compressed -> tiny per-diagonal rows; Toeplitz tile built on-chip.
            bias_arr = compressed_bias_to_diag_rows(
                position_bias.astype(self.dtype), S, S, self.tq)
        else:
            # Fallback: dense per-block-diagonal slabs in HBM.
            bias_arr = expand_bias_block_diagonal(
                position_bias.astype(self.dtype), S, S, self.tq)

        attn = flash_attention_fused_qkv(
            qkv, bias_arr, n_heads=self.n_heads, d_head=self.key_value_proj_dim,
            sm_scale=1.0, causal=self.is_causal, tq=self.tq, tk=self.tk,
            bias_mode=self.bias_mode, roll_params=self.roll_params)

        # attn is already (B, S, H*d_kv): no transposes anywhere.
        out = pallas_linear(attn.reshape(B * S, self.inner_dim),
                            self.wo).reshape(B, S, self.d_model)

        present_key_value_state = None  # TODO(synk): no KV cache / cross-attn
        return (out, present_key_value_state, position_bias)


# ----------------------------------------------------------------------------
# Pure-JAX reference for correctness checking
# ----------------------------------------------------------------------------
def reference_forward(mod, hidden_states, position_bias_compressed):
    B, S, _ = hidden_states.shape
    H, D = mod.n_heads, mod.key_value_proj_dim
    x = hidden_states.astype(jnp.float32)
    w_qkv = mod.w_qkv.astype(jnp.float32)
    wo = mod.wo.astype(jnp.float32)

    qkv = jnp.dot(x, w_qkv, precision="highest")
    q, k, v = jnp.split(qkv, 3, axis=-1)
    q = q.reshape(B, S, H, D)
    k = k.reshape(B, S, H, D)
    v = v.reshape(B, S, H, D)

    bias = expand_virtual_bias(
        position_bias_compressed.astype(jnp.float32), S, S)
    scores = jnp.einsum("bqhd,bkhd->bhqk", q, k, precision="highest") + bias
    if mod.is_causal:
        mask = jnp.tril(jnp.ones((S, S), bool))
        scores = jnp.where(mask, scores, -1e30)
    probs = jax.nn.softmax(scores, axis=-1)
    ctx = jnp.einsum("bhqk,bkhd->bqhd", probs, v, precision="highest")
    return jnp.dot(ctx.reshape(B, S, H * D), wo, precision="highest")


# ----------------------------------------------------------------------------
if __name__ == "__main__":
    # inner_dim = n_heads * d_kv = 128 so the fused-QKV attention BlockSpecs
    # are lane-dense (multiples of 128).
    B, S, d_model, n_heads, d_kv = 2, 256, 128, 8, 16

    key = jax.random.PRNGKey(0)
    k_param, k_hidden = jax.random.split(key)
    hidden_states = jax.random.normal(k_hidden, (B, S, d_model), jnp.float32)

    # ---- f32 instance: strict correctness check ---------------------------
    mod = FlashT5AttentionV7Pallas(
        d_model=d_model, d_kv=d_kv, num_heads=n_heads,
        relative_attention_num_buckets=32,
        relative_attention_max_distance=128,
        has_relative_attention_bias=True,
        is_decoder=False, is_causal=False,
        key=k_param, dtype=jnp.float32)

    out, _, position_bias = mod(hidden_states)
    out = jax.block_until_ready(out)

    ref = reference_forward(mod, hidden_states, position_bias)
    max_err = float(jnp.max(jnp.abs(out - ref)))
    if not jnp.allclose(out, ref, atol=1e-3, rtol=1e-3):
        raise AssertionError(
            f"f32 Pallas output mismatch vs JAX reference (max abs err "
            f"{max_err}, bias_mode={mod.bias_mode})")

    # ---- bf16 instance: exercise the bf16-MXU / halved-DMA path -----------
    mod_bf16 = FlashT5AttentionV7Pallas(
        d_model=d_model, d_kv=d_kv, num_heads=n_heads,
        relative_attention_num_buckets=32,
        relative_attention_max_distance=128,
        has_relative_attention_bias=True,
        is_decoder=False, is_causal=False,
        key=k_param, dtype=jnp.bfloat16)

    hs_bf16 = hidden_states.astype(jnp.bfloat16)
    out_bf16, _, pb_bf16 = mod_bf16(hs_bf16)
    out_bf16 = jax.block_until_ready(out_bf16)
    ref_bf16 = reference_forward(mod_bf16, hs_bf16, pb_bf16)
    if not jnp.allclose(out_bf16.astype(jnp.float32), ref_bf16,
                        atol=5e-2, rtol=5e-2):
        raise AssertionError("bf16 Pallas output mismatch vs JAX reference")

    print("KERNEL_OK")
</pallas_src>

<mosaic_0001>
module attributes {stable_mosaic.version = 11 : i64} {
  func.func @kern(%arg0: memref<1x128xf32, #tpu.memory_space<vmem>>, %arg1: memref<128x128xf32, #tpu.memory_space<vmem>>) attributes {dimension_semantics = [], scalar_prefetch = 0 : i64, scratch_operands = 0 : i64, tpu.core_type = #tpu.core_type<tc>} {
    %c0 = arith.constant 0 : index
    %c0_0 = arith.constant 0 : index
    %0 = vector.load %arg0[%c0, %c0_0] : memref<1x128xf32, #tpu.memory_space<vmem>>, vector<1x128xf32>
    %1 = vector.shape_cast %0 : vector<1x128xf32> to vector<1x128xf32>
    %2 = vector.broadcast %1 : vector<1x128xf32> to vector<128x128xf32>
    %c1_i32 = arith.constant 1 : i32
    %3 = tpu.dynamic_rotate %2 by %c1_i32 dim 1 {stride = 1 : si32, stride_dimension = 0 : si32} : vector<128x128xf32>, i32 -> vector<128x128xf32>
    %c0_1 = arith.constant 0 : index
    %c0_2 = arith.constant 0 : index
    %4 = vector.load %arg1[%c0_1, %c0_2] : memref<128x128xf32, #tpu.memory_space<vmem>>, vector<128x128xf32>
    tpu.vector_store %arg1[%c0_1, %c0_2], %3 {strides = array<i32>} : memref<128x128xf32, #tpu.memory_space<vmem>>, vector<128x128xf32>,
    return
  }
}

module attributes {stable_mosaic.version = 11 : i64} {
  func.func @_linear_kernel(%arg0: i32, %arg1: i32, %arg2: i32, %arg3: memref<256x128xf32, #tpu.memory_space<vmem>>, %arg4: memref<128x384xf32, #tpu.memory_space<vmem>>, %arg5: memref<256x384xf32, #tpu.memory_space<vmem>>, %arg6: memref<256x384xf32, #tpu.memory_space<vmem>>) attributes {dimension_semantics = [#tpu.dimension_semantics<parallel>, #tpu.dimension_semantics<parallel>, #tpu.dimension_semantics<arbitrary>], iteration_bounds = array<i64: 2, 1, 1>, scalar_prefetch = 0 : i64, scratch_operands = 1 : i64, tpu.core_type = #tpu.core_type<tc>, window_params = [{transform_indices = @transform_0, window_bounds = array<i64: 256, 128>}, {transform_indices = @transform_1, window_bounds = array<i64: 128, 384>}, {transform_indices = @transform_2, window_bounds = array<i64: 256, 384>}]} {
    %c0_i32 = arith.constant 0 : i32
    %0 = arith.cmpi eq, %arg2, %c0_i32 : i32
    %1 = arith.extui %0 : i1 to i32
    %c0_i32_0 = arith.constant 0 : i32
    %2 = arith.cmpi ne, %1, %c0_i32_0 : i32
    scf.if %2 {
      %cst_10 = arith.constant 0.000000e+00 : f32
      %12 = vector.broadcast %cst_10 : f32 to vector<256x384xf32>
      %c0_11 = arith.constant 0 : index
      %c0_12 = arith.constant 0 : index
      %13 = vector.load %arg6[%c0_11, %c0_12] : memref<256x384xf32, #tpu.memory_space<vmem>>, vector<256x384xf32>
      tpu.vector_store %arg6[%c0_11, %c0_12], %12 {strides = array<i32>} : memref<256x384xf32, #tpu.memory_space<vmem>>, vector<256x384xf32>,
    } else {
    }
    %c0 = arith.constant 0 : index
    %c0_1 = arith.constant 0 : index
    %3 = vector.load %arg6[%c0, %c0_1] : memref<256x384xf32, #tpu.memory_space<vmem>>, vector<256x384xf32>
    %c0_2 = arith.constant 0 : index
    %c0_3 = arith.constant 0 : index
    %4 = vector.load %arg3[%c0_2, %c0_3] : memref<256x128xf32, #tpu.memory_space<vmem>>, vector<256x128xf32>
    %c0_4 = arith.constant 0 : index
    %c0_5 = arith.constant 0 : index
    %5 = vector.load %arg4[%c0_4, %c0_5] : memref<128x384xf32, #tpu.memory_space<vmem>>, vector<128x384xf32>
    %cst = arith.constant dense<0.000000e+00> : vector<256x384xf32>
    %6 = tpu.matmul %4, %5, %cst {dimension_numbers = #tpu.dot_dimension_numbers<[1], [0], [0], [1], [0, 0, 1, 1], [], []>} : vector<256x128xf32>, vector<128x384xf32>, vector<256x384xf32> -> vector<256x384xf32>
    %7 = arith.addf %3, %6 : vector<256x384xf32>
    %c0_6 = arith.constant 0 : index
    %c0_7 = arith.constant 0 : index
    %8 = vector.load %arg6[%c0_6, %c0_7] : memref<256x384xf32, #tpu.memory_space<vmem>>, vector<256x384xf32>
    tpu.vector_store %arg6[%c0_6, %c0_7], %7 {strides = array<i32>} : memref<256x384xf32, #tpu.memory_space<vmem>>, vector<256x384xf32>,
    %c0_i32_8 = arith.constant 0 : i32
    %9 = arith.cmpi eq, %arg2, %c0_i32_8 : i32
    %10 = arith.extui %9 : i1 to i32
    %c0_i32_9 = arith.constant 0 : i32
    %11 = arith.cmpi ne, %10, %c0_i32_9 : i32
    scf.if %11 {
      %c0_10 = arith.constant 0 : index
      %c0_11 = arith.constant 0 : index
      %12 = vector.load %arg6[%c0_10, %c0_11] : memref<256x384xf32, #tpu.memory_space<vmem>>, vector<256x384xf32>
      %c0_12 = arith.constant 0 : index
      %c0_13 = arith.constant 0 : index
      %13 = vector.load %arg5[%c0_12, %c0_13] : memref<256x384xf32, #tpu.memory_space<vmem>>, vector<256x384xf32>
      tpu.vector_store %arg5[%c0_12, %c0_13], %12 {strides = array<i32>} : memref<256x384xf32, #tpu.memory_space<vmem>>, vector<256x384xf32>,
    } else {
    }
    return
  }
  func.func @transform_0(%arg0: i32, %arg1: i32, %arg2: i32) -> (i32, i32) {
    %c0_i32 = arith.constant 0 : i32
    return %arg0, %arg2 : i32, i32
  }
  func.func @transform_1(%arg0: i32, %arg1: i32, %arg2: i32) -> (i32, i32) {
    %c0_i32 = arith.constant 0 : i32
    return %arg2, %arg1 : i32, i32
  }
  func.func @transform_2(%arg0: i32, %arg1: i32, %arg2: i32) -> (i32, i32) {
    %c0_i32 = arith.constant 0 : i32
    return %arg0, %arg1 : i32, i32
  }
}

</mosaic_0001>

<llo_original>
// kernel: tpu_custom_call.1
$region0: #{tpu_custom_call.1}
  #allocation0 [shape = 'u32[]', space=smem, size = 0x4, offset = 0x4, fixed_abs, tag = 'smem constant byte address 0x4 - core index']
  #allocation1 [shape = 'u32[144,128]{1,0:T(1,128)}', space=vmem, size = 0x12000, scoped, tag = 'internal scratch']
  %s0 = inlined_call_operand.hbm [shape: f32[1,128], index: 0, kind: input, shape index: {}]
  %s1 = inlined_call_operand.hbm [shape: f32[128,128], index: 1, kind: output, shape index: {}]
  %s2 = sld [smem:[#allocation0]]
  $region18: #{tpu_custom_call.1} parent=0
    _
  %s4 = ssub.s32 1, %s2
  %s5 = scalar_select 0, %s4, %s2
  $region1: #{tpu_custom_call.1} parent=0
    #allocation2 [shape = 'u8[512]{0}', space=vmem, size = 0x400, scoped, tag = 'input window, operand 0, single buffered']
    #allocation3 [shape = 's32[1]{0}', space=sflag, size = 0x4, scoped, tag = 'scoped memory for tpu_custom_call.1']
    #allocation4 [shape = 's32[1]{0}', space=sflag, size = 0x4, scoped, tag = 'scoped memory for tpu_custom_call.1']
    #allocation5 [shape = 'u8[65536]{0}', space=vmem, size = 0x10000, scoped, tag = 'output window, operand 0, single buffered']
    %6 = vsyncpa [#allocation3], 0
    %7 = vsyncpa [#allocation4], 0
    // Predicated region
    $region2: #{tpu_custom_call.1} parent=1 // pred_check
      _
    $region3: #{tpu_custom_call.1} parent=1 // pred_check_branch
      %9 = sbr.rel (0) target = $region5
    $region4: #{tpu_custom_call.1} parent=1 // pred_region
      %s11 = ssub.s32 16, 16
      %12 = vsyncadd [#allocation3], %s11
      %s14 = sshll.u32 [#allocation2], 4
      %s15 = int_to_ptr.vmem [resolvable:$true] %s14
      %17 = dma.hbm_to_vmem [thread:$0]  %s0, 16, %s15, [#allocation3]
    $region5: #{tpu_custom_call.1} parent=1 // pred_fallthru
      _
    // Predicated region
    $region6: #{tpu_custom_call.1} parent=1 // pred_check
      _
    $region7: #{tpu_custom_call.1} parent=1 // pred_check_branch
      %19 = sbr.rel (0) target = $region9
    $region8: #{tpu_custom_call.1} parent=1 // pred_region
      %20 = dma.done [#allocation3], 16
    $region9: #{tpu_custom_call.1} parent=1 // pred_fallthru
      _
    %v21 = vld [vmem:[#allocation2] sm:$0x1]
    %v23 = vlaneseq
    %v24 = vshrl.u32 %v23, 7
    %v25 = vsub.s32 0, %v24
    %v26 = vrot.slane %v21, %v25
    %s29 = sor.u32 256, 1
    %30 = vrot.lane.b32.xlu0 %v26, %s29
    %v31 = vpop.permute.xlu0 %30
    %s33 = sor.u32 256, 9
    %34 = vrot.lane.b32.xlu0 %v26, %s33
    %v35 = vpop.permute.xlu0 %34
    %s37 = sor.u32 256, 17
    %38 = vrot.lane.b32.xlu0 %v26, %s37
    %v39 = vpop.permute.xlu0 %38
    %s41 = sor.u32 256, 25
    %42 = vrot.lane.b32.xlu0 %v26, %s41
    %v43 = vpop.permute.xlu0 %42
    %s45 = sor.u32 256, 33
    %46 = vrot.lane.b32.xlu0 %v26, %s45
    %v47 = vpop.permute.xlu0 %46
    %s49 = sor.u32 256, 41
    %50 = vrot.lane.b32.xlu0 %v26, %s49
    %v51 = vpop.permute.xlu0 %50
    %s53 = sor.u32 256, 49
    %54 = vrot.lane.b32.xlu0 %v26, %s53
    %v55 = vpop.permute.xlu0 %54
    %s57 = sor.u32 256, 57
    %58 = vrot.lane.b32.xlu0 %v26, %s57
    %v59 = vpop.permute.xlu0 %58
    %s61 = sor.u32 256, 65
    %62 = vrot.lane.b32.xlu0 %v26, %s61
    %v63 = vpop.permute.xlu0 %62
    %s65 = sor.u32 256, 73
    %66 = vrot.lane.b32.xlu0 %v26, %s65
    %v67 = vpop.permute.xlu0 %66
    %s69 = sor.u32 256, 81
    %70 = vrot.lane.b32.xlu0 %v26, %s69
    %v71 = vpop.permute.xlu0 %70
    %s73 = sor.u32 256, 89
    %74 = vrot.lane.b32.xlu0 %v26, %s73
    %v75 = vpop.permute.xlu0 %74
    %s77 = sor.u32 256, 97
    %78 = vrot.lane.b32.xlu0 %v26, %s77
    %v79 = vpop.permute.xlu0 %78
    %s81 = sor.u32 256, 105
    %82 = vrot.lane.b32.xlu0 %v26, %s81
    %v83 = vpop.permute.xlu0 %82
    %s85 = sor.u32 256, 113
    %86 = vrot.lane.b32.xlu0 %v26, %s85
    %v87 = vpop.permute.xlu0 %86
    %s89 = sor.u32 256, 121
    %90 = vrot.lane.b32.xlu0 %v26, %s89
    %v91 = vpop.permute.xlu0 %90
    %92 = vst [vmem:[#allocation5] sm:$0xff] %v31
    %93 = vst [vmem:[#allocation5 + $0x8] sm:$0xff] %v35
    %94 = vst [vmem:[#allocation5 + $0x10] sm:$0xff] %v39
    %95 = vst [vmem:[#allocation5 + $0x18] sm:$0xff] %v43
    %96 = vst [vmem:[#allocation5 + $0x20] sm:$0xff] %v47
    %97 = vst [vmem:[#allocation5 + $0x28] sm:$0xff] %v51
    %98 = vst [vmem:[#allocation5 + $0x30] sm:$0xff] %v55
    %99 = vst [vmem:[#allocation5 + $0x38] sm:$0xff] %v59
    %100 = vst [vmem:[#allocation5 + $0x40] sm:$0xff] %v63
    %101 = vst [vmem:[#allocation5 + $0x48] sm:$0xff] %v67
    %102 = vst [vmem:[#allocation5 + $0x50] sm:$0xff] %v71
    %103 = vst [vmem:[#allocation5 + $0x58] sm:$0xff] %v75
    %104 = vst [vmem:[#allocation5 + $0x60] sm:$0xff] %v79
    %105 = vst [vmem:[#allocation5 + $0x68] sm:$0xff] %v83
    %106 = vst [vmem:[#allocation5 + $0x70] sm:$0xff] %v87
    %107 = vst [vmem:[#allocation5 + $0x78] sm:$0xff] %v91
    // Predicated region
    $region10: #{tpu_custom_call.1} parent=1 // pred_check
      _
    $region11: #{tpu_custom_call.1} parent=1 // pred_check_branch
      %109 = sbr.rel (0) target = $region13
    $region12: #{tpu_custom_call.1} parent=1 // pred_region
      %s111 = ssub.s32 2048, 2048
      %112 = vsyncadd [#allocation4], %s111
      %s113 = sshll.u32 [#allocation5], 4
      %s114 = int_to_ptr.vmem [resolvable:$true] %s113
      %119 = dma.vmem_to_hbm [thread:$0]  %s114, 2048, %s1, [#allocation4], 128, 128, 8
    $region13: #{tpu_custom_call.1} parent=1 // pred_fallthru
      _
    // Predicated region
    $region14: #{tpu_custom_call.1} parent=1 // pred_check
      _
    $region15: #{tpu_custom_call.1} parent=1 // pred_check_branch
      %121 = sbr.rel (0) target = $region17
    $region16: #{tpu_custom_call.1} parent=1 // pred_region
      %122 = dma.done [#allocation4], 2048
    $region17: #{tpu_custom_call.1} parent=1 // pred_fallthru
      _
    %123 = vsyncpa [#allocation3], 1
    %124 = vsyncpa [#allocation4], 1

// kernel: tpu_custom_call.1
$region0: #{tpu_custom_call.1}
  #allocation0 [shape = 'u32[]', space=smem, size = 0x4, offset = 0x4, fixed_abs, tag = 'smem constant byte address 0x4 - core index']
  #allocation1 [shape = 'u32[144,128]{1,0:T(1,128)}', space=vmem, size = 0x12000, scoped, tag = 'internal scratch']
  #allocation2 [shape = 'f32[256,384]{1,0:T(8,128)}', space=vmem, size = 0x60000, scoped, tag = 'scratch operand']
  %s0 = inlined_call_operand.hbm [shape: f32[512,128], index: 0, kind: input, shape index: {}]
  %s1 = inlined_call_operand.hbm [shape: f32[128,384], index: 1, kind: input, shape index: {}]
  %s2 = inlined_call_operand.hbm [shape: f32[512,384], index: 2, kind: output, shape index: {}]
  %s3 = sld [smem:[#allocation0]]
  $region57: #{tpu_custom_call.1} parent=0
    _
  %s5 = ssub.s32 1, %s3
  %s6 = scalar_select 0, %s5, %s3
  $region1: #{tpu_custom_call.1} parent=0
    #allocation3 [shape = 'u8[262144]{0}', space=vmem, size = 0x40000, scoped, tag = 'input window, operand 0']
    #allocation4 [shape = 's32[2]{0}', space=sflag, size = 0x8, scoped, tag = 'scoped memory for tpu_custom_call.1']
    #allocation5 [shape = 's32[2]{0}', space=sflag, size = 0x8, scoped, tag = 'scoped memory for tpu_custom_call.1']
    #allocation6 [shape = 'u8[196608]{0}', space=vmem, size = 0x30000, scoped, tag = 'input window, operand 1, single buffered']
    #allocation7 [shape = 's32[1]{0}', space=sflag, size = 0x4, scoped, tag = 'scoped memory for tpu_custom_call.1']
    #allocation8 [shape = 'u8[786432]{0}', space=vmem, size = 0xc0000, scoped, tag = 'output window, operand 0']
    %7 = vsyncpa [#allocation4], 0
    %s8 = scalar_lea.sflag [#allocation4], 1
    %9 = vsyncpa %s8, 0
    %10 = vsyncpa [#allocation7], 0
    %11 = vsyncpa [#allocation5], 0
    %s12 = scalar_lea.sflag [#allocation5], 1
    %13 = vsyncpa %s12, 0
    loop: start=0, step=1, limit=4
    $region2: #{tpu_custom_call.1} parent=1 // loop_pre_header
      _
    $region3: #{tpu_custom_call.1} parent=1 // loop_header
      %s15 = sphi 0, %s19
      %p16 = scmp.ge.s32.totalorder %s15, 4
      %s22 = sphi 0, %s41
      %s23 = sphi 0, %s37
      %s24 = sphi 0, %s33
      %s25 = sphi 0, %s22
      %s26 = sphi 0, %s23
      %s27 = sphi 0, %s24
      %s28 = sphi 0, %s25
      %s29 = sphi 0, %s26
      %s30 = sphi 0, %s27
      %s46 = sphi 0, %s48
      %s49 = sphi 0, %s46
      %s50 = sphi 0, %s49
      %s66 = sphi 0, %s50
      %s74 = sphi 0, %s76
      %s77 = sphi 0, %s74
      %s78 = sphi 0, %s77
      %s94 = sphi 0, %s78
      %s102 = sphi 0, %s104
      %s105 = sphi 0, %s102
      %s106 = sphi 0, %s105
      %s122 = sphi 0, %s106
    $region4: #{tpu_custom_call.1} parent=1 // loop_header_branch
      %18 = sbr.rel (%p16) target = $region8
    $region5: #{tpu_custom_call.1} parent=1 // loop_body
      %s20 = ssub.s32 %s15, 1
      %s21 = ssub.s32 %s15, 2
      %s31 = sadd.s32 1, %s24
      %p32 = scmp.ge.s32.totalorder %s31, 1
      %s33 = scalar_select %p32, 0, %s31
      %s34 = sadd.s32 1, %s23
      %s35 = scalar_select %p32, %s34, %s23
      %p36 = scmp.ge.s32.totalorder %s35, 1
      %s37 = scalar_select %p36, 0, %s35
      %s38 = sadd.s32 1, %s22
      %s39 = scalar_select %p36, %s38, %s22
      %p40 = scmp.ge.s32.totalorder %s39, 2
      %s41 = scalar_select %p40, 0, %s39
      %s42 = ssub.s32 %s22, %s41
      %s43 = ssub.s32 %s24, %s33
      %s44 = sor.u32 %s42, %s43
      %p45 = scmp.eq.s32.totalorder %s44, 0
      %s47 = sadd.s32 %s46, 1
      %s48 = scalar_select %p45, %s46, %s47
      %p51 = pneg %p45
      %p52 = scmp.eq.s32.totalorder %s15, 1
      %p53 = por %p51, %p52
      %p54 = scmp.ne.s32.totalorder %s46, %s49
      %p55 = scmp.eq.s32.totalorder %s15, 0
      %p56 = por %p54, %p55
      %p57 = scmp.ne.s32.totalorder %s46, %s49
      %p58 = scmp.eq.s32.totalorder %s20, 1
      %p59 = por %p57, %p58
      %p60 = scmp.ne.s32.totalorder %s49, %s50
      %p61 = scmp.eq.s32.totalorder %s20, 0
      %p62 = por %p60, %p61
      %p63 = scmp.ne.s32.totalorder %s49, %s50
      %p64 = scmp.eq.s32.totalorder %s21, 1
      %p65 = por %p63, %p64
      %p67 = scmp.ne.s32.totalorder %s50, %s66
      %p68 = scmp.eq.s32.totalorder %s21, 0
      %p69 = por %p67, %p68
      %s70 = ssub.s32 %s24, %s33
      %s71 = ssub.s32 %s23, %s37
      %s72 = sor.u32 %s70, %s71
      %p73 = scmp.eq.s32.totalorder %s72, 0
      %s75 = sadd.s32 %s74, 1
      %s76 = scalar_select %p73, %s74, %s75
      %p79 = pneg %p73
      %p80 = scmp.eq.s32.totalorder %s15, 1
      %p81 = por %p79, %p80
      %p82 = scmp.ne.s32.totalorder %s74, %s77
      %p83 = scmp.eq.s32.totalorder %s15, 0
      %p84 = por %p82, %p83
      %p85 = scmp.ne.s32.totalorder %s74, %s77
      %p86 = scmp.eq.s32.totalorder %s20, 1
      %p87 = por %p85, %p86
      %p88 = scmp.ne.s32.totalorder %s77, %s78
      %p89 = scmp.eq.s32.totalorder %s20, 0
      %p90 = por %p88, %p89
      %p91 = scmp.ne.s32.totalorder %s77, %s78
      %p92 = scmp.eq.s32.totalorder %s21, 1
      %p93 = por %p91, %p92
      %p95 = scmp.ne.s32.totalorder %s78, %s94
      %p96 = scmp.eq.s32.totalorder %s21, 0
      %p97 = por %p95, %p96
      %s98 = ssub.s32 %s22, %s41
      %s99 = ssub.s32 %s23, %s37
      %s100 = sor.u32 %s98, %s99
      %p101 = scmp.eq.s32.totalorder %s100, 0
      %s103 = sadd.s32 %s102, 1
      %s104 = scalar_select %p101, %s102, %s103
      %p107 = pneg %p101
      %p108 = scmp.eq.s32.totalorder %s15, 1
      %p109 = por %p107, %p108
      %p110 = scmp.ne.s32.totalorder %s102, %s105
      %p111 = scmp.eq.s32.totalorder %s15, 0
      %p112 = por %p110, %p111
      %p113 = scmp.ne.s32.totalorder %s102, %s105
      %p114 = scmp.eq.s32.totalorder %s20, 1
      %p115 = por %p113, %p114
      %p116 = scmp.ne.s32.totalorder %s105, %s106
      %p117 = scmp.eq.s32.totalorder %s20, 0
      %p118 = por %p116, %p117
      %p119 = scmp.ne.s32.totalorder %s105, %s106
      %p120 = scmp.eq.s32.totalorder %s21, 1
      %p121 = por %p119, %p120
      %p123 = scmp.ne.s32.totalorder %s106, %s122
      %p124 = scmp.eq.s32.totalorder %s21, 0
      %p125 = por %p123, %p124
      %p126 = scmp.le.s32.totalorder 1, %s15
      %p127 = scmp.lt.s32.totalorder %s15, 3
      %p128 = pnand %p126, %p127
      %p129 = pneg %p128
      // Predicated region
      $region9: #{tpu_custom_call.1} parent=5 // pred_check
        _
      $region10: #{tpu_custom_call.1} parent=5 // pred_check_branch
        %131 = sbr.rel (%p128) target = $region12
      $region11: #{tpu_custom_call.1} parent=5 // pred_region
        %s132 = ssub.s32 %s15, 1
        // Predicated region
        $region13: #{tpu_custom_call.1} parent=11 // pred_check
          %p133 = pneg %p90
        $region14: #{tpu_custom_call.1} parent=11 // pred_check_branch
          %135 = sbr.rel (%p133) target = $region16
        $region15: #{tpu_custom_call.1} parent=11 // pred_region
          %s136 = smul.u32 16, %s27
          %s137 = smul.u32 3, %s26
          %s139 = ssub.s32 6144, 6144
          %140 = vsyncadd [#allocation7], %s139
          %s141 = smul.addr %s136, 3
          %s142 = sadd.s32 %s137, %s141
          %s143 = smul.addr %s142, 128
          %s144 = scalar_lea.hbm %s1, %s143
          %s145 = sshll.u32 [#allocation6], 4
          %s146 = int_to_ptr.vmem [resolvable:$true] %s145
          %151 = dma.hbm_to_vmem [thread:$0]  %s144, 6144, %s146, [#allocation7], 384, 384, 24
        $region16: #{tpu_custom_call.1} parent=11 // pred_fallthru
          _
      $region12: #{tpu_custom_call.1} parent=5 // pred_fallthru
        _
      %p152 = scmp.lt.s32.totalorder %s15, 2
      // Predicated region
      $region17: #{tpu_custom_call.1} parent=5 // pred_check
        %p153 = pneg %p152
      $region18: #{tpu_custom_call.1} parent=5 // pred_check_branch
        %155 = sbr.rel (%p153) target = $region20
      $region19: #{tpu_custom_call.1} parent=5 // pred_region
        // Predicated region
        $region21: #{tpu_custom_call.1} parent=19 // pred_check
          %p156 = pneg %p56
        $region22: #{tpu_custom_call.1} parent=19 // pred_check_branch
          %158 = sbr.rel (%p156) target = $region24
        $region23: #{tpu_custom_call.1} parent=19 // pred_region
          %s159 = sand.u32 %s46, 1
          %s160 = scalar_lea.sflag [#allocation4], %s159
          %s161 = sand.u32 %s46, 1
          %s162 = smul.addr %s161, 256
          %s163 = scalar_lea.vmem [#allocation3], %s162
          %s164 = smul.u32 32, %s22
          %s166 = ssub.s32 4096, 4096
          %167 = vsyncadd %s160, %s166
          %s168 = sadd.s32 %s24, %s164
          %s169 = smul.addr %s168, 128
          %s170 = scalar_lea.hbm %s0, %s169
          %s171 = sshll.u32 %s163, 4
          %s172 = int_to_ptr.vmem [resolvable:$true] %s171
          %177 = dma.hbm_to_vmem [thread:$0]  %s170, 4096, %s172, %s160, 128, 128, 8
        $region24: #{tpu_custom_call.1} parent=19 // pred_fallthru
          _
      $region20: #{tpu_custom_call.1} parent=5 // pred_fallthru
        _
      %p178 = scmp.le.s32.totalorder 1, %s15
      %p179 = scmp.lt.s32.totalorder %s15, 3
      %p180 = pnand %p178, %p179
      %p181 = pneg %p180
      // Predicated region
      $region25: #{tpu_custom_call.1} parent=5 // pred_check
        _
      $region26: #{tpu_custom_call.1} parent=5 // pred_check_branch
        %183 = sbr.rel (%p180) target = $region28
      $region27: #{tpu_custom_call.1} parent=5 // pred_region
        %s184 = ssub.s32 %s15, 1
        %s185 = sand.u32 %s49, 1
        %s186 = scalar_lea.sflag [#allocation4], %s185
        %s187 = sand.u32 %s49, 1
        %s188 = smul.addr %s187, 256
        %s189 = scalar_lea.vmem [#allocation3], %s188
        // Predicated region
        $region29: #{tpu_custom_call.1} parent=27 // pred_check
          %p190 = pneg %p62
        $region30: #{tpu_custom_call.1} parent=27 // pred_check_branch
          %192 = sbr.rel (%p190) target = $region32
        $region31: #{tpu_custom_call.1} parent=27 // pred_region
          %193 = dma.done %s186, 4096
        $region32: #{tpu_custom_call.1} parent=27 // pred_fallthru
          _
        // Predicated region
        $region33: #{tpu_custom_call.1} parent=27 // pred_check
          %p194 = pneg %p90
        $region34: #{tpu_custom_call.1} parent=27 // pred_check_branch
          %196 = sbr.rel (%p194) target = $region36
        $region35: #{tpu_custom_call.1} parent=27 // pred_region
          %197 = dma.done [#allocation7], 6144
        $region36: #{tpu_custom_call.1} parent=27 // pred_fallthru
          _
        %s198 = sand.u32 %s49, 1
        %s199 = scalar_lea.sflag [#allocation4], %s198
        %s200 = sand.u32 %s49, 1
        %s201 = smul.addr %s200, 256
        %s202 = scalar_lea.vmem [#allocation3], %s201
        %p203 = pneg %p62
        %p204 = pneg %p59
        %p205 = pneg %p90
        %p206 = pneg %p87
        %p207 = pneg %p118
        %p208 = pneg %p115
        %s209 = sand.u32 %s105, 1
        %s210 = scalar_lea.sflag [#allocation5], %s209
        %s211 = sand.u32 %s105, 1
        %s212 = smul.addr %s211, 768
        %s213 = scalar_lea.vmem [#allocation8], %s212
        %s214 = smul.u32 32, %s25
        %s215 = smul.u32 16, %s27
        %s216 = smul.u32 3, %s26
        %s217 = smul.u32 32, %s25
        %s218 = smul.u32 3, %s26
        %p219 = scmp.eq.s32.totalorder %s27, 0
        // Predicated region
        $region37: #{tpu_custom_call.1} parent=27 // pred_check
          %p220 = pneg %p219
        $region38: #{tpu_custom_call.1} parent=27 // pred_check_branch
          %222 = sbr.rel (%p220) target = $region40
        $region39: #{tpu_custom_call.1} parent=27 // pred_region
          %223 = vst [vmem:[#allocation2] sm:$0xff] 0.0
          %224 = vst [vmem:[#allocation2 + $0x8] sm:$0xff] 0.0
          %225 = vst [vmem:[#allocation2 + $0x10] sm:$0xff] 0.0
          %226 = vst [vmem:[#allocation2 + $0x18] sm:$0xff] 0.0
          %227 = vst [vmem:[#allocation2 + $0x20] sm:$0xff] 0.0
          %228 = vst [vmem:[#allocation2 + $0x28] sm:$0xff] 0.0
          %229 = vst [vmem:[#allocation2 + $0x30] sm:$0xff] 0.0
          %230 = vst [vmem:[#allocation2 + $0x38] sm:$0xff] 0.0
          %231 = vst [vmem:[#allocation2 + $0x40] sm:$0xff] 0.0
          %232 = vst [vmem:[#allocation2 + $0x48] sm:$0xff] 0.0
          %233 = vst [vmem:[#allocation2 + $0x50] sm:$0xff] 0.0
          %234 = vst [vmem:[#allocation2 + $0x58] sm:$0xff] 0.0
          %235 = vst [vmem:[#allocation2 + $0x60] sm:$0xff] 0.0
          %236 = vst [vmem:[#allocation2 + $0x68] sm:$0xff] 0.0
          %237 = vst [vmem:[#allocation2 + $0x70] sm:$0xff] 0.0
          %238 = vst [vmem:[#allocation2 + $0x78] sm:$0xff] 0.0
          %239 = vst [vmem:[#allocation2 + $0x80] sm:$0xff] 0.0
          %240 = vst [vmem:[#allocation2 + $0x88] sm:$0xff] 0.0
          %241 = vst [vmem:[#allocation2 + $0x90] sm:$0xff] 0.0
          %242 = vst [vmem:[#allocation2 + $0x98] sm:$0xff] 0.0
          %243 = vst [vmem:[#allocation2 + $0xa0] sm:$0xff] 0.0
          %244 = vst [vmem:[#allocation2 + $0xa8] sm:$0xff] 0.0
          %245 = vst [vmem:[#allocation2 + $0xb0] sm:$0xff] 0.0
          %246 = vst [vmem:[#allocation2 + $0xb8] sm:$0xff] 0.0
          %247 = vst [vmem:[#allocation2 + $0xc0] sm:$0xff] 0.0
          %248 = vst [vmem:[#allocation2 + $0xc8] sm:$0xff] 0.0
          %249 = vst [vmem:[#allocation2 + $0xd0] sm:$0xff] 0.0
          %250 = vst [vmem:[#allocation2 + $0xd8] sm:$0xff] 0.0
          %251 = vst [vmem:[#allocation2 + $0xe0] sm:$0xff] 0.0
          %252 = vst [vmem:[#allocation2 + $0xe8] sm:$0xff] 0.0
          %253 = vst [vmem:[#allocation2 + $0xf0] sm:$0xff] 0.0
          %254 = vst [vmem:[#allocation2 + $0xf8] sm:$0xff] 0.0
          %255 = vst [vmem:[#allocation2 + $0x100] sm:$0xff] 0.0
          %256 = vst [vmem:[#allocation2 + $0x108] sm:$0xff] 0.0
          %257 = vst [vmem:[#allocation2 + $0x110] sm:$0xff] 0.0
          %258 = vst [vmem:[#allocation2 + $0x118] sm:$0xff] 0.0
          %259 = vst [vmem:[#allocation2 + $0x120] sm:$0xff] 0.0
          %260 = vst [vmem:[#allocation2 + $0x128] sm:$0xff] 0.0
          %261 = vst [vmem:[#allocation2 + $0x130] sm:$0xff] 0.0
          %262 = vst [vmem:[#allocation2 + $0x138] sm:$0xff] 0.0
          %263 = vst [vmem:[#allocation2 + $0x140] sm:$0xff] 0.0
          %264 = vst [vmem:[#allocation2 + $0x148] sm:$0xff] 0.0
          %265 = vst [vmem:[#allocation2 + $0x150] sm:$0xff] 0.0
          %266 = vst [vmem:[#allocation2 + $0x158] sm:$0xff] 0.0
          %267 = vst [vmem:[#allocation2 + $0x160] sm:$0xff] 0.0
          %268 = vst [vmem:[#allocation2 + $0x168] sm:$0xff] 0.0
          %269 = vst [vmem:[#allocation2 + $0x170] sm:$0xff] 0.0
          %270 = vst [vmem:[#allocation2 + $0x178] sm:$0xff] 0.0
          %271 = vst [vmem:[#allocation2 + $0x180] sm:$0xff] 0.0
          %272 = vst [vmem:[#allocation2 + $0x188] sm:$0xff] 0.0
          %273 = vst [vmem:[#allocation2 + $0x190] sm:$0xff] 0.0
          %274 = vst [vmem:[#allocation2 + $0x198] sm:$0xff] 0.0
          %275 = vst [vmem:[#allocation2 + $0x1a0] sm:$0xff] 0.0
          %276 = vst [vmem:[#allocation2 + $0x1a8] sm:$0xff] 0.0
          %277 = vst [vmem:[#allocation2 + $0x1b0] sm:$0xff] 0.0
          %278 = vst [vmem:[#allocation2 + $0x1b8] sm:$0xff] 0.0
          %279 = vst [vmem:[#allocation2 + $0x1c0] sm:$0xff] 0.0
          %280 = vst [vmem:[#allocation2 + $0x1c8] sm:$0xff] 0.0
          %281 = vst [vmem:[#allocation2 + $0x1d0] sm:$0xff] 0.0
          %282 = vst [vmem:[#allocation2 + $0x1d8] sm:$0xff] 0.0
          %283 = vst [vmem:[#allocation2 + $0x1e0] sm:$0xff] 0.0
          %284 = vst [vmem:[#allocation2 + $0x1e8] sm:$0xff] 0.0
          %285 = vst [vmem:[#allocation2 + $0x1f0] sm:$0xff] 0.0
          %286 = vst [vmem:[#allocation2 + $0x1f8] sm:$0xff] 0.0
          %287 = vst [vmem:[#allocation2 + $0x200] sm:$0xff] 0.0
          %288 = vst [vmem:[#allocation2 + $0x208] sm:$0xff] 0.0
          %289 = vst [vmem:[#allocation2 + $0x210] sm:$0xff] 0.0
          %290 = vst [vmem:[#allocation2 + $0x218] sm:$0xff] 0.0
          %291 = vst [vmem:[#allocation2 + $0x220] sm:$0xff] 0.0
          %292 = vst [vmem:[#allocation2 + $0x228] sm:$0xff] 0.0
          %293 = vst [vmem:[#allocation2 + $0x230] sm:$0xff] 0.0
          %294 = vst [vmem:[#allocation2 + $0x238] sm:$0xff] 0.0
          %295 = vst [vmem:[#allocation2 + $0x240] sm:$0xff] 0.0
          %296 = vst [vmem:[#allocation2 + $0x248] sm:$0xff] 0.0
          %297 = vst [vmem:[#allocation2 + $0x250] sm:$0xff] 0.0
          %298 = vst [vmem:[#allocation2 + $0x258] sm:$0xff] 0.0
          %299 = vst [vmem:[#allocation2 + $0x260] sm:$0xff] 0.0
          %300 = vst [vmem:[#allocation2 + $0x268] sm:$0xff] 0.0
          %301 = vst [vmem:[#allocation2 + $0x270] sm:$0xff] 0.0
          %302 = vst [vmem:[#allocation2 + $0x278] sm:$0xff] 0.0
          %303 = vst [vmem:[#allocation2 + $0x280] sm:$0xff] 0.0
          %304 = vst [vmem:[#allocation2 + $0x288] sm:$0xff] 0.0
          %305 = vst [vmem:[#allocation2 + $0x290] sm:$0xff] 0.0
          %306 = vst [vmem:[#allocation2 + $0x298] sm:$0xff] 0.0
          %307 = vst [vmem:[#allocation2 + $0x2a0] sm:$0xff] 0.0
          %308 = vst [vmem:[#allocation2 + $0x2a8] sm:$0xff] 0.0
          %309 = vst [vmem:[#allocation2 + $0x2b0] sm:$0xff] 0.0
          %310 = vst [vmem:[#allocation2 + $0x2b8] sm:$0xff] 0.0
          %311 = vst [vmem:[#allocation2 + $0x2c0] sm:$0xff] 0.0
          %312 = vst [vmem:[#allocation2 + $0x2c8] sm:$0xff] 0.0
          %313 = vst [vmem:[#allocation2 + $0x2d0] sm:$0xff] 0.0
          %314 = vst [vmem:[#allocation2 + $0x2d8] sm:$0xff] 0.0
          %315 = vst [vmem:[#allocation2 + $0x2e0] sm:$0xff] 0.0
          %316 = vst [vmem:[#allocation2 + $0x2e8] sm:$0xff] 0.0
          %317 = vst [vmem:[#allocation2 + $0x2f0] sm:$0xff] 0.0
          %318 = vst [vmem:[#allocation2 + $0x2f8] sm:$0xff] 0.0
        $region40: #{tpu_custom_call.1} parent=27 // pred_fallthru
          _
        %v319 = vld [vmem:[#allocation2] sm:$0xff]
        %v320 = vld [vmem:[#allocation2 + $0x8] sm:$0xff]
        %v321 = vld [vmem:[#allocation2 + $0x10] sm:$0xff]
        %v322 = vld [vmem:[#allocation2 + $0x18] sm:$0xff]
        %v323 = vld [vmem:[#allocation2 + $0x20] sm:$0xff]
        %v324 = vld [vmem:[#allocation2 + $0x28] sm:$0xff]
        %v325 = vld [vmem:[#allocation2 + $0x30] sm:$0xff]
        %v326 = vld [vmem:[#allocation2 + $0x38] sm:$0xff]
        %v327 = vld [vmem:[#allocation2 + $0x40] sm:$0xff]
        %v328 = vld [vmem:[#allocation2 + $0x48] sm:$0xff]
        %v329 = vld [vmem:[#allocation2 + $0x50] sm:$0xff]
        %v330 = vld [vmem:[#allocation2 + $0x58] sm:$0xff]
        %v331 = vld [vmem:[#allocation2 + $0x60] sm:$0xff]
        %v332 = vld [vmem:[#allocation2 + $0x68] sm:$0xff]
        %v333 = vld [vmem:[#allocation2 + $0x70] sm:$0xff]
        %v334 = vld [vmem:[#allocation2 + $0x78] sm:$0xff]
        %v335 = vld [vmem:[#allocation2 + $0x80] sm:$0xff]
        %v336 = vld [vmem:[#allocation2 + $0x88] sm:$0xff]
        %v337 = vld [vmem:[#allocation2 + $0x90] sm:$0xff]
        %v338 = vld [vmem:[#allocation2 + $0x98] sm:$0xff]
        %v339 = vld [vmem:[#allocation2 + $0xa0] sm:$0xff]
        %v340 = vld [vmem:[#allocation2 + $0xa8] sm:$0xff]
        %v341 = vld [vmem:[#allocation2 + $0xb0] sm:$0xff]
        %v342 = vld [vmem:[#allocation2 + $0xb8] sm:$0xff]
        %v343 = vld [vmem:[#allocation2 + $0xc0] sm:$0xff]
        %v344 = vld [vmem:[#allocation2 + $0xc8] sm:$0xff]
        %v345 = vld [vmem:[#allocation2 + $0xd0] sm:$0xff]
        %v346 = vld [vmem:[#allocation2 + $0xd8] sm:$0xff]
        %v347 = vld [vmem:[#allocation2 + $0xe0] sm:$0xff]
        %v348 = vld [vmem:[#allocation2 + $0xe8] sm:$0xff]
        %v349 = vld [vmem:[#allocation2 + $0xf0] sm:$0xff]
        %v350 = vld [vmem:[#allocation2 + $0xf8] sm:$0xff]
        %v351 = vld [vmem:[#allocation2 + $0x100] sm:$0xff]
        %v352 = vld [vmem:[#allocation2 + $0x108] sm:$0xff]
        %v353 = vld [vmem:[#allocation2 + $0x110] sm:$0xff]
        %v354 = vld [vmem:[#allocation2 + $0x118] sm:$0xff]
        %v355 = vld [vmem:[#allocation2 + $0x120] sm:$0xff]
        %v356 = vld [vmem:[#allocation2 + $0x128] sm:$0xff]
        %v357 = vld [vmem:[#allocation2 + $0x130] sm:$0xff]
        %v358 = vld [vmem:[#allocation2 + $0x138] sm:$0xff]
        %v359 = vld [vmem:[#allocation2 + $0x140] sm:$0xff]
        %v360 = vld [vmem:[#allocation2 + $0x148] sm:$0xff]
        %v361 = vld [vmem:[#allocation2 + $0x150] sm:$0xff]
        %v362 = vld [vmem:[#allocation2 + $0x158] sm:$0xff]
        %v363 = vld [vmem:[#allocation2 + $0x160] sm:$0xff]
        %v364 = vld [vmem:[#allocation2 + $0x168] sm:$0xff]
        %v365 = vld [vmem:[#allocation2 + $0x170] sm:$0xff]
        %v366 = vld [vmem:[#allocation2 + $0x178] sm:$0xff]
        %v367 = vld [vmem:[#allocation2 + $0x180] sm:$0xff]
        %v368 = vld [vmem:[#allocation2 + $0x188] sm:$0xff]
        %v369 = vld [vmem:[#allocation2 + $0x190] sm:$0xff]
        %v370 = vld [vmem:[#allocation2 + $0x198] sm:$0xff]
        %v371 = vld [vmem:[#allocation2 + $0x1a0] sm:$0xff]
        %v372 = vld [vmem:[#allocation2 + $0x1a8] sm:$0xff]
        %v373 = vld [vmem:[#allocation2 + $0x1b0] sm:$0xff]
        %v374 = vld [vmem:[#allocation2 + $0x1b8] sm:$0xff]
        %v375 = vld [vmem:[#allocation2 + $0x1c0] sm:$0xff]
        %v376 = vld [vmem:[#allocation2 + $0x1c8] sm:$0xff]
        %v377 = vld [vmem:[#allocation2 + $0x1d0] sm:$0xff]
        %v378 = vld [vmem:[#allocation2 + $0x1d8] sm:$0xff]
        %v379 = vld [vmem:[#allocation2 + $0x1e0] sm:$0xff]
        %v380 = vld [vmem:[#allocation2 + $0x1e8] sm:$0xff]
        %v381 = vld [vmem:[#allocation2 + $0x1f0] sm:$0xff]
        %v382 = vld [vmem:[#allocation2 + $0x1f8] sm:$0xff]
        %v383 = vld [vmem:[#allocation2 + $0x200] sm:$0xff]
        %v384 = vld [vmem:[#allocation2 + $0x208] sm:$0xff]
        %v385 = vld [vmem:[#allocation2 + $0x210] sm:$0xff]
        %v386 = vld [vmem:[#allocation2 + $0x218] sm:$0xff]
        %v387 = vld [vmem:[#allocation2 + $0x220] sm:$0xff]
        %v388 = vld [vmem:[#allocation2 + $0x228] sm:$0xff]
        %v389 = vld [vmem:[#allocation2 + $0x230] sm:$0xff]
        %v390 = vld [vmem:[#allocation2 + $0x238] sm:$0xff]
        %v391 = vld [vmem:[#allocation2 + $0x240] sm:$0xff]
        %v392 = vld [vmem:[#allocation2 + $0x248] sm:$0xff]
        %v393 = vld [vmem:[#allocation2 + $0x250] sm:$0xff]
        %v394 = vld [vmem:[#allocation2 + $0x258] sm:$0xff]
        %v395 = vld [vmem:[#allocation2 + $0x260] sm:$0xff]
        %v396 = vld [vmem:[#allocation2 + $0x268] sm:$0xff]
        %v397 = vld [vmem:[#allocation2 + $0x270] sm:$0xff]
        %v398 = vld [vmem:[#allocation2 + $0x278] sm:$0xff]
        %v399 = vld [vmem:[#allocation2 + $0x280] sm:$0xff]
        %v400 = vld [vmem:[#allocation2 + $0x288] sm:$0xff]
        %v401 = vld [vmem:[#allocation2 + $0x290] sm:$0xff]
        %v402 = vld [vmem:[#allocation2 + $0x298] sm:$0xff]
        %v403 = vld [vmem:[#allocation2 + $0x2a0] sm:$0xff]
        %v404 = vld [vmem:[#allocation2 + $0x2a8] sm:$0xff]
        %v405 = vld [vmem:[#allocation2 + $0x2b0] sm:$0xff]
        %v406 = vld [vmem:[#allocation2 + $0x2b8] sm:$0xff]
        %v407 = vld [vmem:[#allocation2 + $0x2c0] sm:$0xff]
        %v408 = vld [vmem:[#allocation2 + $0x2c8] sm:$0xff]
        %v409 = vld [vmem:[#allocation2 + $0x2d0] sm:$0xff]
        %v410 = vld [vmem:[#allocation2 + $0x2d8] sm:$0xff]
        %v411 = vld [vmem:[#allocation2 + $0x2e0] sm:$0xff]
        %v412 = vld [vmem:[#allocation2 + $0x2e8] sm:$0xff]
        %v413 = vld [vmem:[#allocation2 + $0x2f0] sm:$0xff]
        %v414 = vld [vmem:[#allocation2 + $0x2f8] sm:$0xff]
        %v415 = vld [vmem:[%s189] sm:$0xff]
        %v416 = vld [vmem:[%s189 + $0x8] sm:$0xff]
        %v417 = vld [vmem:[%s189 + $0x10] sm:$0xff]
        %v418 = vld [vmem:[%s189 + $0x18] sm:$0xff]
        %v419 = vld [vmem:[%s189 + $0x20] sm:$0xff]
        %v420 = vld [vmem:[%s189 + $0x28] sm:$0xff]
        %v421 = vld [vmem:[%s189 + $0x30] sm:$0xff]
        %v422 = vld [vmem:[%s189 + $0x38] sm:$0xff]
        %v423 = vld [vmem:[%s189 + $0x40] sm:$0xff]
        %v424 = vld [vmem:[%s189 + $0x48] sm:$0xff]
        %v425 = vld [vmem:[%s189 + $0x50] sm:$0xff]
        %v426 = vld [vmem:[%s189 + $0x58] sm:$0xff]
        %v427 = vld [vmem:[%s189 + $0x60] sm:$0xff]
        %v428 = vld [vmem:[%s189 + $0x68] sm:$0xff]
        %v429 = vld [vmem:[%s189 + $0x70] sm:$0xff]
        %v430 = vld [vmem:[%s189 + $0x78] sm:$0xff]
        %v431 = vld [vmem:[%s189 + $0x80] sm:$0xff]
        %v432 = vld [vmem:[%s189 + $0x88] sm:$0xff]
        %v433 = vld [vmem:[%s189 + $0x90] sm:$0xff]
        %v434 = vld [vmem:[%s189 + $0x98] sm:$0xff]
        %v435 = vld [vmem:[%s189 + $0xa0] sm:$0xff]
        %v436 = vld [vmem:[%s189 + $0xa8] sm:$0xff]
        %v437 = vld [vmem:[%s189 + $0xb0] sm:$0xff]
        %v438 = vld [vmem:[%s189 + $0xb8] sm:$0xff]
        %v439 = vld [vmem:[%s189 + $0xc0] sm:$0xff]
        %v440 = vld [vmem:[%s189 + $0xc8] sm:$0xff]
        %v441 = vld [vmem:[%s189 + $0xd0] sm:$0xff]
        %v442 = vld [vmem:[%s189 + $0xd8] sm:$0xff]
        %v443 = vld [vmem:[%s189 + $0xe0] sm:$0xff]
        %v444 = vld [vmem:[%s189 + $0xe8] sm:$0xff]
        %v445 = vld [vmem:[%s189 + $0xf0] sm:$0xff]
        %v446 = vld [vmem:[%s189 + $0xf8] sm:$0xff]
        %v447 = vld [vmem:[#allocation6] sm:$0xff]
        %v448 = vld [vmem:[#allocation6 + $0x8] sm:$0xff]
        %v449 = vld [vmem:[#allocation6 + $0x10] sm:$0xff]
        %v450 = vld [vmem:[#allocation6 + $0x18] sm:$0xff]
        %v451 = vld [vmem:[#allocation6 + $0x20] sm:$0xff]
        %v452 = vld [vmem:[#allocation6 + $0x28] sm:$0xff]
        %v453 = vld [vmem:[#allocation6 + $0x30] sm:$0xff]
        %v454 = vld [vmem:[#allocation6 + $0x38] sm:$0xff]
        %v455 = vld [vmem:[#allocation6 + $0x40] sm:$0xff]
        %v456 = vld [vmem:[#allocation6 + $0x48] sm:$0xff]
        %v457 = vld [vmem:[#allocation6 + $0x50] sm:$0xff]
        %v458 = vld [vmem:[#allocation6 + $0x58] sm:$0xff]
        %v459 = vld [vmem:[#allocation6 + $0x60] sm:$0xff]
        %v460 = vld [vmem:[#allocation6 + $0x68] sm:$0xff]
        %v461 = vld [vmem:[#allocation6 + $0x70] sm:$0xff]
        %v462 = vld [vmem:[#allocation6 + $0x78] sm:$0xff]
        %v463 = vld [vmem:[#allocation6 + $0x80] sm:$0xff]
        %v464 = vld [vmem:[#allocation6 + $0x88] sm:$0xff]
        %v465 = vld [vmem:[#allocation6 + $0x90] sm:$0xff]
        %v466 = vld [vmem:[#allocation6 + $0x98] sm:$0xff]
        %v467 = vld [vmem:[#allocation6 + $0xa0] sm:$0xff]
        %v468 = vld [vmem:[#allocation6 + $0xa8] sm:$0xff]
        %v469 = vld [vmem:[#allocation6 + $0xb0] sm:$0xff]
        %v470 = vld [vmem:[#allocation6 + $0xb8] sm:$0xff]
        %v471 = vld [vmem:[#allocation6 + $0xc0] sm:$0xff]
        %v472 = vld [vmem:[#allocation6 + $0xc8] sm:$0xff]
        %v473 = vld [vmem:[#allocation6 + $0xd0] sm:$0xff]
        %v474 = vld [vmem:[#allocation6 + $0xd8] sm:$0xff]
        %v475 = vld [vmem:[#allocation6 + $0xe0] sm:$0xff]
        %v476 = vld [vmem:[#allocation6 + $0xe8] sm:$0xff]
        %v477 = vld [vmem:[#allocation6 + $0xf0] sm:$0xff]
        %v478 = vld [vmem:[#allocation6 + $0xf8] sm:$0xff]
        %v479 = vld [vmem:[#allocation6 + $0x100] sm:$0xff]
        %v480 = vld [vmem:[#allocation6 + $0x108] sm:$0xff]
        %v481 = vld [vmem:[#allocation6 + $0x110] sm:$0xff]
        %v482 = vld [vmem:[#allocation6 + $0x118] sm:$0xff]
        %v483 = vld [vmem:[#allocation6 + $0x120] sm:$0xff]
        %v484 = vld [vmem:[#allocation6 + $0x128] sm:$0xff]
        %v485 = vld [vmem:[#allocation6 + $0x130] sm:$0xff]
        %v486 = vld [vmem:[#allocation6 + $0x138] sm:$0xff]
        %v487 = vld [vmem:[#allocation6 + $0x140] sm:$0xff]
        %v488 = vld [vmem:[#allocation6 + $0x148] sm:$0xff]
        %v489 = vld [vmem:[#allocation6 + $0x150] sm:$0xff]
        %v490 = vld [vmem:[#allocation6 + $0x158] sm:$0xff]
        %v491 = vld [vmem:[#allocation6 + $0x160] sm:$0xff]
        %v492 = vld [vmem:[#allocation6 + $0x168] sm:$0xff]
        %v493 = vld [vmem:[#allocation6 + $0x170] sm:$0xff]
        %v494 = vld [vmem:[#allocation6 + $0x178] sm:$0xff]
        %495 = vmatprep.subr.mxu0 %v448
        %496 = vmatpush1.msra.mxu0 %v447
        %497 = vmatprep.subr.mxu0 %v451
        %498 = vmatpush1.msra.mxu0 %v450
        %499 = vmatprep.subr.mxu0 %v454
        %500 = vmatpush1.msra.mxu0 %v453
        %501 = vmatprep.subr.mxu0 %v457
        %502 = vmatpush1.msra.mxu0 %v456
        %503 = vmatprep.subr.mxu0 %v460
        %504 = vmatpush1.msra.mxu0 %v459
        %505 = vmatprep.subr.mxu0 %v463
        %506 = vmatpush1.msra.mxu0 %v462
        %507 = vmatprep.subr.mxu0 %v466
        %508 = vmatpush1.msra.mxu0 %v465
        %509 = vmatprep.subr.mxu0 %v469
        %510 = vmatpush1.msra.mxu0 %v468
        %511 = vmatprep.subr.mxu0 %v472
        %512 = vmatpush1.msra.mxu0 %v471
        %513 = vmatprep.subr.mxu0 %v475
        %514 = vmatpush1.msra.mxu0 %v474
        %515 = vmatprep.subr.mxu0 %v478
        %516 = vmatpush1.msra.mxu0 %v477
        %517 = vmatprep.subr.mxu0 %v481
        %518 = vmatpush1.msra.mxu0 %v480
        %519 = vmatprep.subr.mxu0 %v484
        %520 = vmatpush1.msra.mxu0 %v483
        %521 = vmatprep.subr.mxu0 %v487
        %522 = vmatpush1.msra.mxu0 %v486
        %523 = vmatprep.subr.mxu0 %v490
        %524 = vmatpush1.msra.mxu0 %v489
        %525 = vmatprep.subr.mxu0 %v493
        %526 = vmatpush1.msra.mxu0 %v492
        %527 = vmatprep.subr.mxu0 0.0
        %528 = vmatpush1.msra.mxu0 0.0
        %529 = vmatprep.subr.mxu0 0.0
        %530 = vmatpush1.msra.mxu0 0.0
        %531 = vmatprep.subr.mxu0 0.0
        %532 = vmatpush1.msra.mxu0 0.0
        %533 = vmatprep.subr.mxu0 0.0
        %534 = vmatpush1.msra.mxu0 0.0
        %535 = vmatprep.subr.mxu0 0.0
        %536 = vmatpush1.msra.mxu0 0.0
        %537 = vmatprep.subr.mxu0 0.0
        %538 = vmatpush1.msra.mxu0 0.0
        %539 = vmatprep.subr.mxu0 0.0
        %540 = vmatpush1.msra.mxu0 0.0
        %541 = vmatprep.subr.mxu0 0.0
        %542 = vmatpush1.msra.mxu0 0.0
        %543 = vmatprep.subr.mxu0 0.0
        %544 = vmatpush1.msra.mxu0 0.0
        %545 = vmatprep.subr.mxu0 0.0
        %546 = vmatpush1.msra.mxu0 0.0
        %547 = vmatprep.subr.mxu0 0.0
        %548 = vmatpush1.msra.mxu0 0.0
        %549 = vmatprep.subr.mxu0 0.0
        %550 = vmatpush1.msra.mxu0 0.0
        %551 = vmatprep.subr.mxu0 0.0
        %552 = vmatpush1.msra.mxu0 0.0
        %553 = vmatprep.subr.mxu0 0.0
        %554 = vmatpush1.msra.mxu0 0.0
        %555 = vmatprep.subr.mxu0 0.0
        %556 = vmatpush1.msra.mxu0 0.0
        %557 = vmatprep.subr.mxu0 0.0
        %558 = vmatpush1.msra.mxu0 0.0
        %559 = vmatprep.mubr.f32.mxu0 0.0
        %560 = vmatmul.mubr.f32.gmra.mrb[0].mxu0 %v415
        %v561 = vpop.f32.mrb[0].mxu0
        %v562 = vadd.f32 0.0, %v561
        %v563 = vpop.f32.mrb[0].mxu0
        %v564 = vadd.f32 0.0, %v563
        %565 = vmatprep.mubr.f32.mxu0 0.0
        %566 = vmatmul.mubr.f32.gmra.mrb[0].mxu0 %v416
        %v567 = vpop.f32.mrb[0].mxu0
        %v568 = vadd.f32 0.0, %v567
        %v569 = vpop.f32.mrb[0].mxu0
        %v570 = vadd.f32 0.0, %v569
        %571 = vmatprep.mubr.f32.mxu0 0.0
        %572 = vmatmul.mubr.f32.gmra.mrb[0].mxu0 %v417
        %v573 = vpop.f32.mrb[0].mxu0
        %v574 = vadd.f32 0.0, %v573
        %v575 = vpop.f32.mrb[0].mxu0
        %v576 = vadd.f32 0.0, %v575
        %577 = vmatprep.mubr.f32.mxu0 0.0
        %578 = vmatmul.mubr.f32.gmra.mrb[0].mxu0 %v418
        %v579 = vpop.f32.mrb[0].mxu0
        %v580 = vadd.f32 0.0, %v579
        %v581 = vpop.f32.mrb[0].mxu0
        %v582 = vadd.f32 0.0, %v581
        %583 = vmatprep.mubr.f32.mxu0 0.0
        %584 = vmatmul.mubr.f32.gmra.mrb[0].mxu0 %v419
        %v585 = vpop.f32.mrb[0].mxu0
        %v586 = vadd.f32 0.0, %v585
        %v587 = vpop.f32.mrb[0].mxu0
        %v588 = vadd.f32 0.0, %v587
        %589 = vmatprep.mubr.f32.mxu0 0.0
        %590 = vmatmul.mubr.f32.gmra.mrb[0].mxu0 %v420
        %v591 = vpop.f32.mrb[0].mxu0
        %v592 = vadd.f32 0.0, %v591
        %v593 = vpop.f32.mrb[0].mxu0
        %v594 = vadd.f32 0.0, %v593
        %595 = vmatprep.mubr.f32.mxu0 0.0
        %596 = vmatmul.mubr.f32.gmra.mrb[0].mxu0 %v421
        %v597 = vpop.f32.mrb[0].mxu0
        %v598 = vadd.f32 0.0, %v597
        %v599 = vpop.f32.mrb[0].mxu0
        %v600 = vadd.f32 0.0, %v599
        %601 = vmatprep.mubr.f32.mxu0 0.0
        %602 = vmatmul.mubr.f32.gmra.mrb[0].mxu0 %v422
        %v603 = vpop.f32.mrb[0].mxu0
        %v604 = vadd.f32 0.0, %v603
        %v605 = vpop.f32.mrb[0].mxu0
        %v606 = vadd.f32 0.0, %v605
        %607 = vmatprep.mubr.f32.mxu0 0.0
        %608 = vmatmul.mubr.f32.gmra.mrb[0].mxu0 %v423
        %v609 = vpop.f32.mrb[0].mxu0
        %v610 = vadd.f32 0.0, %v609
        %v611 = vpop.f32.mrb[0].mxu0
        %v612 = vadd.f32 0.0, %v611
        %613 = vmatprep.mubr.f32.mxu0 0.0
        %614 = vmatmul.mubr.f32.gmra.mrb[0].mxu0 %v424
        %v615 = vpop.f32.mrb[0].mxu0
        %v616 = vadd.f32 0.0, %v615
        %v617 = vpop.f32.mrb[0].mxu0
        %v618 = vadd.f32 0.0, %v617
        %619 = vmatprep.mubr.f32.mxu0 0.0
        %620 = vmatmul.mubr.f32.gmra.mrb[0].mxu0 %v425
        %v621 = vpop.f32.mrb[0].mxu0
        %v622 = vadd.f32 0.0, %v621
        %v623 = vpop.f32.mrb[0].mxu0
        %v624 = vadd.f32 0.0, %v623
        %625 = vmatprep.mubr.f32.mxu0 0.0
        %626 = vmatmul.mubr.f32.gmra.mrb[0].mxu0 %v426
        %v627 = vpop.f32.mrb[0].mxu0
        %v628 = vadd.f32 0.0, %v627
        %v629 = vpop.f32.mrb[0].mxu0
        %v630 = vadd.f32 0.0, %v629
        %631 = vmatprep.mubr.f32.mxu0 0.0
        %632 = vmatmul.mubr.f32.gmra.mrb[0].mxu0 %v427
        %v633 = vpop.f32.mrb[0].mxu0
        %v634 = vadd.f32 0.0, %v633
        %v635 = vpop.f32.mrb[0].mxu0
        %v636 = vadd.f32 0.0, %v635
        %637 = vmatprep.mubr.f32.mxu0 0.0
        %638 = vmatmul.mubr.f32.gmra.mrb[0].mxu0 %v428
        %v639 = vpop.f32.mrb[0].mxu0
        %v640 = vadd.f32 0.0, %v639
        %v641 = vpop.f32.mrb[0].mxu0
        %v642 = vadd.f32 0.0, %v641
        %643 = vmatprep.mubr.f32.mxu0 0.0
        %644 = vmatmul.mubr.f32.gmra.mrb[0].mxu0 %v429
        %v645 = vpop.f32.mrb[0].mxu0
        %v646 = vadd.f32 0.0, %v645
        %v647 = vpop.f32.mrb[0].mxu0
        %v648 = vadd.f32 0.0, %v647
        %649 = vmatprep.mubr.f32.mxu0 0.0
        %650 = vmatmul.mubr.f32.gmra.mrb[0].mxu0 %v430
        %v651 = vpop.f32.mrb[0].mxu0
        %v652 = vadd.f32 0.0, %v651
        %v653 = vpop.f32.mrb[0].mxu0
        %v654 = vadd.f32 0.0, %v653
        %655 = vmatprep.mubr.f32.mxu0 0.0
        %656 = vmatmul.mubr.f32.gmra.mrb[0].mxu0 %v431
        %v657 = vpop.f32.mrb[0].mxu0
        %v658 = vadd.f32 0.0, %v657
        %v659 = vpop.f32.mrb[0].mxu0
        %v660 = vadd.f32 0.0, %v659
        %661 = vmatprep.mubr.f32.mxu0 0.0
        %662 = vmatmul.mubr.f32.gmra.mrb[0].mxu0 %v432
        %v663 = vpop.f32.mrb[0].mxu0
        %v664 = vadd.f32 0.0, %v663
        %v665 = vpop.f32.mrb[0].mxu0
        %v666 = vadd.f32 0.0, %v665
        %667 = vmatprep.mubr.f32.mxu0 0.0
        %668 = vmatmul.mubr.f32.gmra.mrb[0].mxu0 %v433
        %v669 = vpop.f32.mrb[0].mxu0
        %v670 = vadd.f32 0.0, %v669
        %v671 = vpop.f32.mrb[0].mxu0
        %v672 = vadd.f32 0.0, %v671
        %673 = vmatprep.mubr.f32.mxu0 0.0
        %674 = vmatmul.mubr.f32.gmra.mrb[0].mxu0 %v434
        %v675 = vpop.f32.mrb[0].mxu0
        %v676 = vadd.f32 0.0, %v675
        %v677 = vpop.f32.mrb[0].mxu0
        %v678 = vadd.f32 0.0, %v677
        %679 = vmatprep.mubr.f32.mxu0 0.0
        %680 = vmatmul.mubr.f32.gmra.mrb[0].mxu0 %v435
        %v681 = vpop.f32.mrb[0].mxu0
        %v682 = vadd.f32 0.0, %v681
        %v683 = vpop.f32.mrb[0].mxu0
        %v684 = vadd.f32 0.0, %v683
        %685 = vmatprep.mubr.f32.mxu0 0.0
        %686 = vmatmul.mubr.f32.gmra.mrb[0].mxu0 %v436
        %v687 = vpop.f32.mrb[0].mxu0
        %v688 = vadd.f32 0.0, %v687
        %v689 = vpop.f32.mrb[0].mxu0
        %v690 = vadd.f32 0.0, %v689
        %691 = vmatprep.mubr.f32.mxu0 0.0
        %692 = vmatmul.mubr.f32.gmra.mrb[0].mxu0 %v437
        %v693 = vpop.f32.mrb[0].mxu0
        %v694 = vadd.f32 0.0, %v693
        %v695 = vpop.f32.mrb[0].mxu0
        %v696 = vadd.f32 0.0, %v695
        %697 = vmatprep.mubr.f32.mxu0 0.0
        %698 = vmatmul.mubr.f32.gmra.mrb[0].mxu0 %v438
        %v699 = vpop.f32.mrb[0].mxu0
        %v700 = vadd.f32 0.0, %v699
        %v701 = vpop.f32.mrb[0].mxu0
        %v702 = vadd.f32 0.0, %v701
        %703 = vmatprep.mubr.f32.mxu0 0.0
        %704 = vmatmul.mubr.f32.gmra.mrb[0].mxu0 %v439
        %v705 = vpop.f32.mrb[0].mxu0
        %v706 = vadd.f32 0.0, %v705
        %v707 = vpop.f32.mrb[0].mxu0
        %v708 = vadd.f32 0.0, %v707
        %709 = vmatprep.mubr.f32.mxu0 0.0
        %710 = vmatmul.mubr.f32.gmra.mrb[0].mxu0 %v440
        %v711 = vpop.f32.mrb[0].mxu0
        %v712 = vadd.f32 0.0, %v711
        %v713 = vpop.f32.mrb[0].mxu0
        %v714 = vadd.f32 0.0, %v713
        %715 = vmatprep.mubr.f32.mxu0 0.0
        %716 = vmatmul.mubr.f32.gmra.mrb[0].mxu0 %v441
        %v717 = vpop.f32.mrb[0].mxu0
        %v718 = vadd.f32 0.0, %v717
        %v719 = vpop.f32.mrb[0].mxu0
        %v720 = vadd.f32 0.0, %v719
        %721 = vmatprep.mubr.f32.mxu0 0.0
        %722 = vmatmul.mubr.f32.gmra.mrb[0].mxu0 %v442
        %v723 = vpop.f32.mrb[0].mxu0
        %v724 = vadd.f32 0.0, %v723
        %v725 = vpop.f32.mrb[0].mxu0
        %v726 = vadd.f32 0.0, %v725
        %727 = vmatprep.mubr.f32.mxu0 0.0
        %728 = vmatmul.mubr.f32.gmra.mrb[0].mxu0 %v443
        %v729 = vpop.f32.mrb[0].mxu0
        %v730 = vadd.f32 0.0, %v729
        %v731 = vpop.f32.mrb[0].mxu0
        %v732 = vadd.f32 0.0, %v731
        %733 = vmatprep.mubr.f32.mxu0 0.0
        %734 = vmatmul.mubr.f32.gmra.mrb[0].mxu0 %v444
        %v735 = vpop.f32.mrb[0].mxu0
        %v736 = vadd.f32 0.0, %v735
        %v737 = vpop.f32.mrb[0].mxu0
        %v738 = vadd.f32 0.0, %v737
        %739 = vmatprep.mubr.f32.mxu0 0.0
        %740 = vmatmul.mubr.f32.gmra.mrb[0].mxu0 %v445
        %v741 = vpop.f32.mrb[0].mxu0
        %v742 = vadd.f32 0.0, %v741
        %v743 = vpop.f32.mrb[0].mxu0
        %v744 = vadd.f32 0.0, %v743
        %745 = vmatprep.mubr.f32.mxu0 0.0
        %746 = vmatmul.mubr.f32.gmra.mrb[0].mxu0 %v446
        %v747 = vpop.f32.mrb[0].mxu0
        %v748 = vadd.f32 0.0, %v747
        %v749 = vpop.f32.mrb[0].mxu0
        %v750 = vadd.f32 0.0, %v749
        %751 = vdwg.mxu0
        %752 = vmatprep.subr.mxu0 0.0
        %753 = vmatpush1.msra.mxu0 %v449
        %754 = vmatprep.subr.mxu0 0.0
        %755 = vmatpush1.msra.mxu0 %v452
        %756 = vmatprep.subr.mxu0 0.0
        %757 = vmatpush1.msra.mxu0 %v455
        %758 = vmatprep.subr.mxu0 0.0
        %759 = vmatpush1.msra.mxu0 %v458
        %760 = vmatprep.subr.mxu0 0.0
        %761 = vmatpush1.msra.mxu0 %v461
        %762 = vmatprep.subr.mxu0 0.0
        %763 = vmatpush1.msra.mxu0 %v464
        %764 = vmatprep.subr.mxu0 0.0
        %765 = vmatpush1.msra.mxu0 %v467
        %766 = vmatprep.subr.mxu0 0.0
        %767 = vmatpush1.msra.mxu0 %v470
        %768 = vmatprep.subr.mxu0 0.0
        %769 = vmatpush1.msra.mxu0 %v473
        %770 = vmatprep.subr.mxu0 0.0
        %771 = vmatpush1.msra.mxu0 %v476
        %772 = vmatprep.subr.mxu0 0.0
        %773 = vmatpush1.msra.mxu0 %v479
        %774 = vmatprep.subr.mxu0 0.0
        %775 = vmatpush1.msra.mxu0 %v482
        %776 = vmatprep.subr.mxu0 0.0
        %777 = vmatpush1.msra.mxu0 %v485
        %778 = vmatprep.subr.mxu0 0.0
        %779 = vmatpush1.msra.mxu0 %v488
        %780 = vmatprep.subr.mxu0 0.0
        %781 = vmatpush1.msra.mxu0 %v491
        %782 = vmatprep.subr.mxu0 0.0
        %783 = vmatpush1.msra.mxu0 %v494
        %784 = vmatprep.subr.mxu0 0.0
        %785 = vmatpush1.msra.mxu0 0.0
        %786 = vmatprep.subr.mxu0 0.0
        %787 = vmatpush1.msra.mxu0 0.0
        %788 = vmatprep.subr.mxu0 0.0
        %789 = vmatpush1.msra.mxu0 0.0
        %790 = vmatprep.subr.mxu0 0.0
        %791 = vmatpush1.msra.mxu0 0.0
        %792 = vmatprep.subr.mxu0 0.0
        %793 = vmatpush1.msra.mxu0 0.0
        %794 = vmatprep.subr.mxu0 0.0
        %795 = vmatpush1.msra.mxu0 0.0
        %796 = vmatprep.subr.mxu0 0.0
        %797 = vmatpush1.msra.mxu0 0.0
        %798 = vmatprep.subr.mxu0 0.0
        %799 = vmatpush1.msra.mxu0 0.0
        %800 = vmatprep.subr.mxu0 0.0
        %801 = vmatpush1.msra.mxu0 0.0
        %802 = vmatprep.subr.mxu0 0.0
        %803 = vmatpush1.msra.mxu0 0.0
        %804 = vmatprep.subr.mxu0 0.0
        %805 = vmatpush1.msra.mxu0 0.0
        %806 = vmatprep.subr.mxu0 0.0
        %807 = vmatpush1.msra.mxu0 0.0
        %808 = vmatprep.subr.mxu0 0.0
        %809 = vmatpush1.msra.mxu0 0.0
        %810 = vmatprep.subr.mxu0 0.0
        %811 = vmatpush1.msra.mxu0 0.0
        %812 = vmatprep.subr.mxu0 0.0
        %813 = vmatpush1.msra.mxu0 0.0
        %814 = vmatprep.subr.mxu0 0.0
        %815 = vmatpush1.msra.mxu0 0.0
        %816 = vmatprep.mubr.f32.mxu0 0.0
        %817 = vmatmul.mubr.f32.gmra.mrb[0].mxu0 %v415
        %v818 = vpop.f32.mrb[0].mxu0
        %v819 = vadd.f32 0.0, %v818
        %v820 = vpop.f32.mrb[0].mxu0
        %821 = vmatprep.mubr.f32.mxu0 0.0
        %822 = vmatmul.mubr.f32.gmra.mrb[0].mxu0 %v416
        %v823 = vpop.f32.mrb[0].mxu0
        %v824 = vadd.f32 0.0, %v823
        %v825 = vpop.f32.mrb[0].mxu0
        %826 = vmatprep.mubr.f32.mxu0 0.0
        %827 = vmatmul.mubr.f32.gmra.mrb[0].mxu0 %v417
        %v828 = vpop.f32.mrb[0].mxu0
        %v829 = vadd.f32 0.0, %v828
        %v830 = vpop.f32.mrb[0].mxu0
        %831 = vmatprep.mubr.f32.mxu0 0.0
        %832 = vmatmul.mubr.f32.gmra.mrb[0].mxu0 %v418
        %v833 = vpop.f32.mrb[0].mxu0
        %v834 = vadd.f32 0.0, %v833
        %v835 = vpop.f32.mrb[0].mxu0
        %836 = vmatprep.mubr.f32.mxu0 0.0
        %837 = vmatmul.mubr.f32.gmra.mrb[0].mxu0 %v419
        %v838 = vpop.f32.mrb[0].mxu0
        %v839 = vadd.f32 0.0, %v838
        %v840 = vpop.f32.mrb[0].mxu0
        %841 = vmatprep.mubr.f32.mxu0 0.0
        %842 = vmatmul.mubr.f32.gmra.mrb[0].mxu0 %v420
        %v843 = vpop.f32.mrb[0].mxu0
        %v844 = vadd.f32 0.0, %v843
        %v845 = vpop.f32.mrb[0].mxu0
        %846 = vmatprep.mubr.f32.mxu0 0.0
        %847 = vmatmul.mubr.f32.gmra.mrb[0].mxu0 %v421
        %v848 = vpop.f32.mrb[0].mxu0
        %v849 = vadd.f32 0.0, %v848
        %v850 = vpop.f32.mrb[0].mxu0
        %851 = vmatprep.mubr.f32.mxu0 0.0
        %852 = vmatmul.mubr.f32.gmra.mrb[0].mxu0 %v422
        %v853 = vpop.f32.mrb[0].mxu0
        %v854 = vadd.f32 0.0, %v853
        %v855 = vpop.f32.mrb[0].mxu0
        %856 = vmatprep.mubr.f32.mxu0 0.0
        %857 = vmatmul.mubr.f32.gmra.mrb[0].mxu0 %v423
        %v858 = vpop.f32.mrb[0].mxu0
        %v859 = vadd.f32 0.0, %v858
        %v860 = vpop.f32.mrb[0].mxu0
        %861 = vmatprep.mubr.f32.mxu0 0.0
        %862 = vmatmul.mubr.f32.gmra.mrb[0].mxu0 %v424
        %v863 = vpop.f32.mrb[0].mxu0
        %v864 = vadd.f32 0.0, %v863
        %v865 = vpop.f32.mrb[0].mxu0
        %866 = vmatprep.mubr.f32.mxu0 0.0
        %867 = vmatmul.mubr.f32.gmra.mrb[0].mxu0 %v425
        %v868 = vpop.f32.mrb[0].mxu0
        %v869 = vadd.f32 0.0, %v868
        %v870 = vpop.f32.mrb[0].mxu0
        %871 = vmatprep.mubr.f32.mxu0 0.0
        %872 = vmatmul.mubr.f32.gmra.mrb[0].mxu0 %v426
        %v873 = vpop.f32.mrb[0].mxu0
        %v874 = vadd.f32 0.0, %v873
        %v875 = vpop.f32.mrb[0].mxu0
        %876 = vmatprep.mubr.f32.mxu0 0.0
        %877 = vmatmul.mubr.f32.gmra.mrb[0].mxu0 %v427
        %v878 = vpop.f32.mrb[0].mxu0
        %v879 = vadd.f32 0.0, %v878
        %v880 = vpop.f32.mrb[0].mxu0
        %881 = vmatprep.mubr.f32.mxu0 0.0
        %882 = vmatmul.mubr.f32.gmra.mrb[0].mxu0 %v428
        %v883 = vpop.f32.mrb[0].mxu0
        %v884 = vadd.f32 0.0, %v883
        %v885 = vpop.f32.mrb[0].mxu0
        %886 = vmatprep.mubr.f32.mxu0 0.0
        %887 = vmatmul.mubr.f32.gmra.mrb[0].mxu0 %v429
        %v888 = vpop.f32.mrb[0].mxu0
        %v889 = vadd.f32 0.0, %v888
        %v890 = vpop.f32.mrb[0].mxu0
        %891 = vmatprep.mubr.f32.mxu0 0.0
        %892 = vmatmul.mubr.f32.gmra.mrb[0].mxu0 %v430
        %v893 = vpop.f32.mrb[0].mxu0
        %v894 = vadd.f32 0.0, %v893
        %v895 = vpop.f32.mrb[0].mxu0
        %896 = vmatprep.mubr.f32.mxu0 0.0
        %897 = vmatmul.mubr.f32.gmra.mrb[0].mxu0 %v431
        %v898 = vpop.f32.mrb[0].mxu0
        %v899 = vadd.f32 0.0, %v898
        %v900 = vpop.f32.mrb[0].mxu0
        %901 = vmatprep.mubr.f32.mxu0 0.0
        %902 = vmatmul.mubr.f32.gmra.mrb[0].mxu0 %v432
        %v903 = vpop.f32.mrb[0].mxu0
        %v904 = vadd.f32 0.0, %v903
        %v905 = vpop.f32.mrb[0].mxu0
        %906 = vmatprep.mubr.f32.mxu0 0.0
        %907 = vmatmul.mubr.f32.gmra.mrb[0].mxu0 %v433
        %v908 = vpop.f32.mrb[0].mxu0
        %v909 = vadd.f32 0.0, %v908
        %v910 = vpop.f32.mrb[0].mxu0
        %911 = vmatprep.mubr.f32.mxu0 0.0
        %912 = vmatmul.mubr.f32.gmra.mrb[0].mxu0 %v434
        %v913 = vpop.f32.mrb[0].mxu0
        %v914 = vadd.f32 0.0, %v913
        %v915 = vpop.f32.mrb[0].mxu0
        %916 = vmatprep.mubr.f32.mxu0 0.0
        %917 = vmatmul.mubr.f32.gmra.mrb[0].mxu0 %v435
        %v918 = vpop.f32.mrb[0].mxu0
        %v919 = vadd.f32 0.0, %v918
        %v920 = vpop.f32.mrb[0].mxu0
        %921 = vmatprep.mubr.f32.mxu0 0.0
        %922 = vmatmul.mubr.f32.gmra.mrb[0].mxu0 %v436
        %v923 = vpop.f32.mrb[0].mxu0
        %v924 = vadd.f32 0.0, %v923
        %v925 = vpop.f32.mrb[0].mxu0
        %926 = vmatprep.mubr.f32.mxu0 0.0
        %927 = vmatmul.mubr.f32.gmra.mrb[0].mxu0 %v437
        %v928 = vpop.f32.mrb[0].mxu0
        %v929 = vadd.f32 0.0, %v928
        %v930 = vpop.f32.mrb[0].mxu0
        %931 = vmatprep.mubr.f32.mxu0 0.0
        %932 = vmatmul.mubr.f32.gmra.mrb[0].mxu0 %v438
        %v933 = vpop.f32.mrb[0].mxu0
        %v934 = vadd.f32 0.0, %v933
        %v935 = vpop.f32.mrb[0].mxu0
        %936 = vmatprep.mubr.f32.mxu0 0.0
        %937 = vmatmul.mubr.f32.gmra.mrb[0].mxu0 %v439
        %v938 = vpop.f32.mrb[0].mxu0
        %v939 = vadd.f32 0.0, %v938
        %v940 = vpop.f32.mrb[0].mxu0
        %941 = vmatprep.mubr.f32.mxu0 0.0
        %942 = vmatmul.mubr.f32.gmra.mrb[0].mxu0 %v440
        %v943 = vpop.f32.mrb[0].mxu0
        %v944 = vadd.f32 0.0, %v943
        %v945 = vpop.f32.mrb[0].mxu0
        %946 = vmatprep.mubr.f32.mxu0 0.0
        %947 = vmatmul.mubr.f32.gmra.mrb[0].mxu0 %v441
        %v948 = vpop.f32.mrb[0].mxu0
        %v949 = vadd.f32 0.0, %v948
        %v950 = vpop.f32.mrb[0].mxu0
        %951 = vmatprep.mubr.f32.mxu0 0.0
        %952 = vmatmul.mubr.f32.gmra.mrb[0].mxu0 %v442
        %v953 = vpop.f32.mrb[0].mxu0
        %v954 = vadd.f32 0.0, %v953
        %v955 = vpop.f32.mrb[0].mxu0
        %956 = vmatprep.mubr.f32.mxu0 0.0
        %957 = vmatmul.mubr.f32.gmra.mrb[0].mxu0 %v443
        %v958 = vpop.f32.mrb[0].mxu0
        %v959 = vadd.f32 0.0, %v958
        %v960 = vpop.f32.mrb[0].mxu0
        %961 = vmatprep.mubr.f32.mxu0 0.0
        %962 = vmatmul.mubr.f32.gmra.mrb[0].mxu0 %v444
        %v963 = vpop.f32.mrb[0].mxu0
        %v964 = vadd.f32 0.0, %v963
        %v965 = vpop.f32.mrb[0].mxu0
        %966 = vmatprep.mubr.f32.mxu0 0.0
        %967 = vmatmul.mubr.f32.gmra.mrb[0].mxu0 %v445
        %v968 = vpop.f32.mrb[0].mxu0
        %v969 = vadd.f32 0.0, %v968
        %v970 = vpop.f32.mrb[0].mxu0
        %971 = vmatprep.mubr.f32.mxu0 0.0
        %972 = vmatmul.mubr.f32.gmra.mrb[0].mxu0 %v446
        %v973 = vpop.f32.mrb[0].mxu0
        %v974 = vadd.f32 0.0, %v973
        %v975 = vpop.f32.mrb[0].mxu0
        %976 = vdwg.mxu0
        %v977 = vadd.f32 %v319, %v562
        %v978 = vadd.f32 %v320, %v564
        %v979 = vadd.f32 %v321, %v819
        %v980 = vadd.f32 %v322, %v568
        %v981 = vadd.f32 %v323, %v570
        %v982 = vadd.f32 %v324, %v824
        %v983 = vadd.f32 %v325, %v574
        %v984 = vadd.f32 %v326, %v576
        %v985 = vadd.f32 %v327, %v829
        %v986 = vadd.f32 %v328, %v580
        %v987 = vadd.f32 %v329, %v582
        %v988 = vadd.f32 %v330, %v834
        %v989 = vadd.f32 %v331, %v586
        %v990 = vadd.f32 %v332, %v588
        %v991 = vadd.f32 %v333, %v839
        %v992 = vadd.f32 %v334, %v592
        %v993 = vadd.f32 %v335, %v594
        %v994 = vadd.f32 %v336, %v844
        %v995 = vadd.f32 %v337, %v598
        %v996 = vadd.f32 %v338, %v600
        %v997 = vadd.f32 %v339, %v849
        %v998 = vadd.f32 %v340, %v604
        %v999 = vadd.f32 %v341, %v606
        %v1000 = vadd.f32 %v342, %v854
        %v1001 = vadd.f32 %v343, %v610
        %v1002 = vadd.f32 %v344, %v612
        %v1003 = vadd.f32 %v345, %v859
        %v1004 = vadd.f32 %v346, %v616
        %v1005 = vadd.f32 %v347, %v618
        %v1006 = vadd.f32 %v348, %v864
        %v1007 = vadd.f32 %v349, %v622
        %v1008 = vadd.f32 %v350, %v624
        %v1009 = vadd.f32 %v351, %v869
        %v1010 = vadd.f32 %v352, %v628
        %v1011 = vadd.f32 %v353, %v630
        %v1012 = vadd.f32 %v354, %v874
        %v1013 = vadd.f32 %v355, %v634
        %v1014 = vadd.f32 %v356, %v636
        %v1015 = vadd.f32 %v357, %v879
        %v1016 = vadd.f32 %v358, %v640
        %v1017 = vadd.f32 %v359, %v642
        %v1018 = vadd.f32 %v360, %v884
        %v1019 = vadd.f32 %v361, %v646
        %v1020 = vadd.f32 %v362, %v648
        %v1021 = vadd.f32 %v363, %v889
        %v1022 = vadd.f32 %v364, %v652
        %v1023 = vadd.f32 %v365, %v654
        %v1024 = vadd.f32 %v366, %v894
        %v1025 = vadd.f32 %v367, %v658
        %v1026 = vadd.f32 %v368, %v660
        %v1027 = vadd.f32 %v369, %v899
        %v1028 = vadd.f32 %v370, %v664
        %v1029 = vadd.f32 %v371, %v666
        %v1030 = vadd.f32 %v372, %v904
        %v1031 = vadd.f32 %v373, %v670
        %v1032 = vadd.f32 %v374, %v672
        %v1033 = vadd.f32 %v375, %v909
        %v1034 = vadd.f32 %v376, %v676
        %v1035 = vadd.f32 %v377, %v678
        %v1036 = vadd.f32 %v378, %v914
        %v1037 = vadd.f32 %v379, %v682
        %v1038 = vadd.f32 %v380, %v684
        %v1039 = vadd.f32 %v381, %v919
        %v1040 = vadd.f32 %v382, %v688
        %v1041 = vadd.f32 %v383, %v690
        %v1042 = vadd.f32 %v384, %v924
        %v1043 = vadd.f32 %v385, %v694
        %v1044 = vadd.f32 %v386, %v696
        %v1045 = vadd.f32 %v387, %v929
        %v1046 = vadd.f32 %v388, %v700
        %v1047 = vadd.f32 %v389, %v702
        %v1048 = vadd.f32 %v390, %v934
        %v1049 = vadd.f32 %v391, %v706
        %v1050 = vadd.f32 %v392, %v708
        %v1051 = vadd.f32 %v393, %v939
        %v1052 = vadd.f32 %v394, %v712
        %v1053 = vadd.f32 %v395, %v714
        %v1054 = vadd.f32 %v396, %v944
        %v1055 = vadd.f32 %v397, %v718
        %v1056 = vadd.f32 %v398, %v720
        %v1057 = vadd.f32 %v399, %v949
        %v1058 = vadd.f32 %v400, %v724
        %v1059 = vadd.f32 %v401, %v726
        %v1060 = vadd.f32 %v402, %v954
        %v1061 = vadd.f32 %v403, %v730
        %v1062 = vadd.f32 %v404, %v732
        %v1063 = vadd.f32 %v405, %v959
        %v1064 = vadd.f32 %v406, %v736
        %v1065 = vadd.f32 %v407, %v738
        %v1066 = vadd.f32 %v408, %v964
        %v1067 = vadd.f32 %v409, %v742
        %v1068 = vadd.f32 %v410, %v744
        %v1069 = vadd.f32 %v411, %v969
        %v1070 = vadd.f32 %v412, %v748
        %v1071 = vadd.f32 %v413, %v750
        %v1072 = vadd.f32 %v414, %v974
        %1073 = vst [vmem:[#allocation2] sm:$0xff] %v977
        %1074 = vst [vmem:[#allocation2 + $0x8] sm:$0xff] %v978
        %1075 = vst [vmem:[#allocation2 + $0x10] sm:$0xff] %v979
        %1076 = vst [vmem:[#allocation2 + $0x18] sm:$0xff] %v980
        %1077 = vst [vmem:[#allocation2 + $0x20] sm:$0xff] %v981
        %1078 = vst [vmem:[#allocation2 + $0x28] sm:$0xff] %v982
        %1079 = vst [vmem:[#allocation2 + $0x30] sm:$0xff] %v983
        %1080 = vst [vmem:[#allocation2 + $0x38] sm:$0xff] %v984
        %1081 = vst [vmem:[#allocation2 + $0x40] sm:$0xff] %v985
        %1082 = vst [vmem:[#allocation2 + $0x48] sm:$0xff] %v986
        %1083 = vst [vmem:[#allocation2 + $0x50] sm:$0xff] %v987
        %1084 = vst [vmem:[#allocation2 + $0x58] sm:$0xff] %v988
        %1085 = vst [vmem:[#allocation2 + $0x60] sm:$0xff] %v989
        %1086 = vst [vmem:[#allocation2 + $0x68] sm:$0xff] %v990
        %1087 = vst [vmem:[#allocation2 + $0x70] sm:$0xff] %v991
        %1088 = vst [vmem:[#allocation2 + $0x78] sm:$0xff] %v992
        %1089 = vst [vmem:[#allocation2 + $0x80] sm:$0xff] %v993
        %1090 = vst [vmem:[#allocation2 + $0x88] sm:$0xff] %v994
        %1091 = vst [vmem:[#allocation2 + $0x90] sm:$0xff] %v995
        %1092 = vst [vmem:[#allocation2 + $0x98] sm:$0xff] %v996
        %1093 = vst [vmem:[#allocation2 + $0xa0] sm:$0xff] %v997
        %1094 = vst [vmem:[#allocation2 + $0xa8] sm:$0xff] %v998
        %1095 = vst [vmem:[#allocation2 + $0xb0] sm:$0xff] %v999
        %1096 = vst [vmem:[#allocation2 + $0xb8] sm:$0xff] %v1000
        %1097 = vst [vmem:[#allocation2 + $0xc0] sm:$0xff] %v1001
        %1098 = vst [vmem:[#allocation2 + $0xc8] sm:$0xff] %v1002
        %1099 = vst [vmem:[#allocation2 + $0xd0] sm:$0xff] %v1003
        %1100 = vst [vmem:[#allocation2 + $0xd8] sm:$0xff] %v1004
        %1101 = vst [vmem:[#allocation2 + $0xe0] sm:$0xff] %v1005
        %1102 = vst [vmem:[#allocation2 + $0xe8] sm:$0xff] %v1006
        %1103 = vst [vmem:[#allocation2 + $0xf0] sm:$0xff] %v1007
        %1104 = vst [vmem:[#allocation2 + $0xf8] sm:$0xff] %v1008
        %1105 = vst [vmem:[#allocation2 + $0x100] sm:$0xff] %v1009
        %1106 = vst [vmem:[#allocation2 + $0x108] sm:$0xff] %v1010
        %1107 = vst [vmem:[#allocation2 + $0x110] sm:$0xff] %v1011
        %1108 = vst [vmem:[#allocation2 + $0x118] sm:$0xff] %v1012
        %1109 = vst [vmem:[#allocation2 + $0x120] sm:$0xff] %v1013
        %1110 = vst [vmem:[#allocation2 + $0x128] sm:$0xff] %v1014
        %1111 = vst [vmem:[#allocation2 + $0x130] sm:$0xff] %v1015
        %1112 = vst [vmem:[#allocation2 + $0x138] sm:$0xff] %v1016
        %1113 = vst [vmem:[#allocation2 + $0x140] sm:$0xff] %v1017
        %1114 = vst [vmem:[#allocation2 + $0x148] sm:$0xff] %v1018
        %1115 = vst [vmem:[#allocation2 + $0x150] sm:$0xff] %v1019
        %1116 = vst [vmem:[#allocation2 + $0x158] sm:$0xff] %v1020
        %1117 = vst [vmem:[#allocation2 + $0x160] sm:$0xff] %v1021
        %1118 = vst [vmem:[#allocation2 + $0x168] sm:$0xff] %v1022
        %1119 = vst [vmem:[#allocation2 + $0x170] sm:$0xff] %v1023
        %1120 = vst [vmem:[#allocation2 + $0x178] sm:$0xff] %v1024
        %1121 = vst [vmem:[#allocation2 + $0x180] sm:$0xff] %v1025
        %1122 = vst [vmem:[#allocation2 + $0x188] sm:$0xff] %v1026
        %1123 = vst [vmem:[#allocation2 + $0x190] sm:$0xff] %v1027
        %1124 = vst [vmem:[#allocation2 + $0x198] sm:$0xff] %v1028
        %1125 = vst [vmem:[#allocation2 + $0x1a0] sm:$0xff] %v1029
        %1126 = vst [vmem:[#allocation2 + $0x1a8] sm:$0xff] %v1030
        %1127 = vst [vmem:[#allocation2 + $0x1b0] sm:$0xff] %v1031
        %1128 = vst [vmem:[#allocation2 + $0x1b8] sm:$0xff] %v1032
        %1129 = vst [vmem:[#allocation2 + $0x1c0] sm:$0xff] %v1033
        %1130 = vst [vmem:[#allocation2 + $0x1c8] sm:$0xff] %v1034
        %1131 = vst [vmem:[#allocation2 + $0x1d0] sm:$0xff] %v1035
        %1132 = vst [vmem:[#allocation2 + $0x1d8] sm:$0xff] %v1036
        %1133 = vst [vmem:[#allocation2 + $0x1e0] sm:$0xff] %v1037
        %1134 = vst [vmem:[#allocation2 + $0x1e8] sm:$0xff] %v1038
        %1135 = vst [vmem:[#allocation2 + $0x1f0] sm:$0xff] %v1039
        %1136 = vst [vmem:[#allocation2 + $0x1f8] sm:$0xff] %v1040
        %1137 = vst [vmem:[#allocation2 + $0x200] sm:$0xff] %v1041
        %1138 = vst [vmem:[#allocation2 + $0x208] sm:$0xff] %v1042
        %1139 = vst [vmem:[#allocation2 + $0x210] sm:$0xff] %v1043
        %1140 = vst [vmem:[#allocation2 + $0x218] sm:$0xff] %v1044
        %1141 = vst [vmem:[#allocation2 + $0x220] sm:$0xff] %v1045
        %1142 = vst [vmem:[#allocation2 + $0x228] sm:$0xff] %v1046
        %1143 = vst [vmem:[#allocation2 + $0x230] sm:$0xff] %v1047
        %1144 = vst [vmem:[#allocation2 + $0x238] sm:$0xff] %v1048
        %1145 = vst [vmem:[#allocation2 + $0x240] sm:$0xff] %v1049
        %1146 = vst [vmem:[#allocation2 + $0x248] sm:$0xff] %v1050
        %1147 = vst [vmem:[#allocation2 + $0x250] sm:$0xff] %v1051
        %1148 = vst [vmem:[#allocation2 + $0x258] sm:$0xff] %v1052
        %1149 = vst [vmem:[#allocation2 + $0x260] sm:$0xff] %v1053
        %1150 = vst [vmem:[#allocation2 + $0x268] sm:$0xff] %v1054
        %1151 = vst [vmem:[#allocation2 + $0x270] sm:$0xff] %v1055
        %1152 = vst [vmem:[#allocation2 + $0x278] sm:$0xff] %v1056
        %1153 = vst [vmem:[#allocation2 + $0x280] sm:$0xff] %v1057
        %1154 = vst [vmem:[#allocation2 + $0x288] sm:$0xff] %v1058
        %1155 = vst [vmem:[#allocation2 + $0x290] sm:$0xff] %v1059
        %1156 = vst [vmem:[#allocation2 + $0x298] sm:$0xff] %v1060
        %1157 = vst [vmem:[#allocation2 + $0x2a0] sm:$0xff] %v1061
        %1158 = vst [vmem:[#allocation2 + $0x2a8] sm:$0xff] %v1062
        %1159 = vst [vmem:[#allocation2 + $0x2b0] sm:$0xff] %v1063
        %1160 = vst [vmem:[#allocation2 + $0x2b8] sm:$0xff] %v1064
        %1161 = vst [vmem:[#allocation2 + $0x2c0] sm:$0xff] %v1065
        %1162 = vst [vmem:[#allocation2 + $0x2c8] sm:$0xff] %v1066
        %1163 = vst [vmem:[#allocation2 + $0x2d0] sm:$0xff] %v1067
        %1164 = vst [vmem:[#allocation2 + $0x2d8] sm:$0xff] %v1068
        %1165 = vst [vmem:[#allocation2 + $0x2e0] sm:$0xff] %v1069
        %1166 = vst [vmem:[#allocation2 + $0x2e8] sm:$0xff] %v1070
        %1167 = vst [vmem:[#allocation2 + $0x2f0] sm:$0xff] %v1071
        %1168 = vst [vmem:[#allocation2 + $0x2f8] sm:$0xff] %v1072
        // Predicated region
        $region41: #{tpu_custom_call.1} parent=27 // pred_check
          %p1169 = pneg %p219
        $region42: #{tpu_custom_call.1} parent=27 // pred_check_branch
          %1171 = sbr.rel (%p1169) target = $region44
        $region43: #{tpu_custom_call.1} parent=27 // pred_region
          %v1172 = vld [vmem:[#allocation2] sm:$0xff]
          %v1173 = vld [vmem:[#allocation2 + $0x8] sm:$0xff]
          %v1174 = vld [vmem:[#allocation2 + $0x10] sm:$0xff]
          %v1175 = vld [vmem:[#allocation2 + $0x18] sm:$0xff]
          %v1176 = vld [vmem:[#allocation2 + $0x20] sm:$0xff]
          %v1177 = vld [vmem:[#allocation2 + $0x28] sm:$0xff]
          %v1178 = vld [vmem:[#allocation2 + $0x30] sm:$0xff]
          %v1179 = vld [vmem:[#allocation2 + $0x38] sm:$0xff]
          %v1180 = vld [vmem:[#allocation2 + $0x40] sm:$0xff]
          %v1181 = vld [vmem:[#allocation2 + $0x48] sm:$0xff]
          %v1182 = vld [vmem:[#allocation2 + $0x50] sm:$0xff]
          %v1183 = vld [vmem:[#allocation2 + $0x58] sm:$0xff]
          %v1184 = vld [vmem:[#allocation2 + $0x60] sm:$0xff]
          %v1185 = vld [vmem:[#allocation2 + $0x68] sm:$0xff]
          %v1186 = vld [vmem:[#allocation2 + $0x70] sm:$0xff]
          %v1187 = vld [vmem:[#allocation2 + $0x78] sm:$0xff]
          %v1188 = vld [vmem:[#allocation2 + $0x80] sm:$0xff]
          %v1189 = vld [vmem:[#allocation2 + $0x88] sm:$0xff]
          %v1190 = vld [vmem:[#allocation2 + $0x90] sm:$0xff]
          %v1191 = vld [vmem:[#allocation2 + $0x98] sm:$0xff]
          %v1192 = vld [vmem:[#allocation2 + $0xa0] sm:$0xff]
          %v1193 = vld [vmem:[#allocation2 + $0xa8] sm:$0xff]
          %v1194 = vld [vmem:[#allocation2 + $0xb0] sm:$0xff]
          %v1195 = vld [vmem:[#allocation2 + $0xb8] sm:$0xff]
          %v1196 = vld [vmem:[#allocation2 + $0xc0] sm:$0xff]
          %v1197 = vld [vmem:[#allocation2 + $0xc8] sm:$0xff]
          %v1198 = vld [vmem:[#allocation2 + $0xd0] sm:$0xff]
          %v1199 = vld [vmem:[#allocation2 + $0xd8] sm:$0xff]
          %v1200 = vld [vmem:[#allocation2 + $0xe0] sm:$0xff]
          %v1201 = vld [vmem:[#allocation2 + $0xe8] sm:$0xff]
          %v1202 = vld [vmem:[#allocation2 + $0xf0] sm:$0xff]
          %v1203 = vld [vmem:[#allocation2 + $0xf8] sm:$0xff]
          %v1204 = vld [vmem:[#allocation2 + $0x100] sm:$0xff]
          %v1205 = vld [vmem:[#allocation2 + $0x108] sm:$0xff]
          %v1206 = vld [vmem:[#allocation2 + $0x110] sm:$0xff]
          %v1207 = vld [vmem:[#allocation2 + $0x118] sm:$0xff]
          %v1208 = vld [vmem:[#allocation2 + $0x120] sm:$0xff]
          %v1209 = vld [vmem:[#allocation2 + $0x128] sm:$0xff]
          %v1210 = vld [vmem:[#allocation2 + $0x130] sm:$0xff]
          %v1211 = vld [vmem:[#allocation2 + $0x138] sm:$0xff]
          %v1212 = vld [vmem:[#allocation2 + $0x140] sm:$0xff]
          %v1213 = vld [vmem:[#allocation2 + $0x148] sm:$0xff]
          %v1214 = vld [vmem:[#allocation2 + $0x150] sm:$0xff]
          %v1215 = vld [vmem:[#allocation2 + $0x158] sm:$0xff]
          %v1216 = vld [vmem:[#allocation2 + $0x160] sm:$0xff]
          %v1217 = vld [vmem:[#allocation2 + $0x168] sm:$0xff]
          %v1218 = vld [vmem:[#allocation2 + $0x170] sm:$0xff]
          %v1219 = vld [vmem:[#allocation2 + $0x178] sm:$0xff]
          %v1220 = vld [vmem:[#allocation2 + $0x180] sm:$0xff]
          %v1221 = vld [vmem:[#allocation2 + $0x188] sm:$0xff]
          %v1222 = vld [vmem:[#allocation2 + $0x190] sm:$0xff]
          %v1223 = vld [vmem:[#allocation2 + $0x198] sm:$0xff]
          %v1224 = vld [vmem:[#allocation2 + $0x1a0] sm:$0xff]
          %v1225 = vld [vmem:[#allocation2 + $0x1a8] sm:$0xff]
          %v1226 = vld [vmem:[#allocation2 + $0x1b0] sm:$0xff]
          %v1227 = vld [vmem:[#allocation2 + $0x1b8] sm:$0xff]
          %v1228 = vld [vmem:[#allocation2 + $0x1c0] sm:$0xff]
          %v1229 = vld [vmem:[#allocation2 + $0x1c8] sm:$0xff]
          %v1230 = vld [vmem:[#allocation2 + $0x1d0] sm:$0xff]
          %v1231 = vld [vmem:[#allocation2 + $0x1d8] sm:$0xff]
          %v1232 = vld [vmem:[#allocation2 + $0x1e0] sm:$0xff]
          %v1233 = vld [vmem:[#allocation2 + $0x1e8] sm:$0xff]
          %v1234 = vld [vmem:[#allocation2 + $0x1f0] sm:$0xff]
          %v1235 = vld [vmem:[#allocation2 + $0x1f8] sm:$0xff]
          %v1236 = vld [vmem:[#allocation2 + $0x200] sm:$0xff]
          %v1237 = vld [vmem:[#allocation2 + $0x208] sm:$0xff]
          %v1238 = vld [vmem:[#allocation2 + $0x210] sm:$0xff]
          %v1239 = vld [vmem:[#allocation2 + $0x218] sm:$0xff]
          %v1240 = vld [vmem:[#allocation2 + $0x220] sm:$0xff]
          %v1241 = vld [vmem:[#allocation2 + $0x228] sm:$0xff]
          %v1242 = vld [vmem:[#allocation2 + $0x230] sm:$0xff]
          %v1243 = vld [vmem:[#allocation2 + $0x238] sm:$0xff]
          %v1244 = vld [vmem:[#allocation2 + $0x240] sm:$0xff]
          %v1245 = vld [vmem:[#allocation2 + $0x248] sm:$0xff]
          %v1246 = vld [vmem:[#allocation2 + $0x250] sm:$0xff]
          %v1247 = vld [vmem:[#allocation2 + $0x258] sm:$0xff]
          %v1248 = vld [vmem:[#allocation2 + $0x260] sm:$0xff]
          %v1249 = vld [vmem:[#allocation2 + $0x268] sm:$0xff]
          %v1250 = vld [vmem:[#allocation2 + $0x270] sm:$0xff]
          %v1251 = vld [vmem:[#allocation2 + $0x278] sm:$0xff]
          %v1252 = vld [vmem:[#allocation2 + $0x280] sm:$0xff]
          %v1253 = vld [vmem:[#allocation2 + $0x288] sm:$0xff]
          %v1254 = vld [vmem:[#allocation2 + $0x290] sm:$0xff]
          %v1255 = vld [vmem:[#allocation2 + $0x298] sm:$0xff]
          %v1256 = vld [vmem:[#allocation2 + $0x2a0] sm:$0xff]
          %v1257 = vld [vmem:[#allocation2 + $0x2a8] sm:$0xff]
          %v1258 = vld [vmem:[#allocation2 + $0x2b0] sm:$0xff]
          %v1259 = vld [vmem:[#allocation2 + $0x2b8] sm:$0xff]
          %v1260 = vld [vmem:[#allocation2 + $0x2c0] sm:$0xff]
          %v1261 = vld [vmem:[#allocation2 + $0x2c8] sm:$0xff]
          %v1262 = vld [vmem:[#allocation2 + $0x2d0] sm:$0xff]
          %v1263 = vld [vmem:[#allocation2 + $0x2d8] sm:$0xff]
          %v1264 = vld [vmem:[#allocation2 + $0x2e0] sm:$0xff]
          %v1265 = vld [vmem:[#allocation2 + $0x2e8] sm:$0xff]
          %v1266 = vld [vmem:[#allocation2 + $0x2f0] sm:$0xff]
          %v1267 = vld [vmem:[#allocation2 + $0x2f8] sm:$0xff]
          %1268 = vst [vmem:[%s213] sm:$0xff] %v1172
          %1269 = vst [vmem:[%s213 + $0x8] sm:$0xff] %v1173
          %1270 = vst [vmem:[%s213 + $0x10] sm:$0xff] %v1174
          %1271 = vst [vmem:[%s213 + $0x18] sm:$0xff] %v1175
          %1272 = vst [vmem:[%s213 + $0x20] sm:$0xff] %v1176
          %1273 = vst [vmem:[%s213 + $0x28] sm:$0xff] %v1177
          %1274 = vst [vmem:[%s213 + $0x30] sm:$0xff] %v1178
          %1275 = vst [vmem:[%s213 + $0x38] sm:$0xff] %v1179
          %1276 = vst [vmem:[%s213 + $0x40] sm:$0xff] %v1180
          %1277 = vst [vmem:[%s213 + $0x48] sm:$0xff] %v1181
          %1278 = vst [vmem:[%s213 + $0x50] sm:$0xff] %v1182
          %1279 = vst [vmem:[%s213 + $0x58] sm:$0xff] %v1183
          %1280 = vst [vmem:[%s213 + $0x60] sm:$0xff] %v1184
          %1281 = vst [vmem:[%s213 + $0x68] sm:$0xff] %v1185
          %1282 = vst [vmem:[%s213 + $0x70] sm:$0xff] %v1186
          %1283 = vst [vmem:[%s213 + $0x78] sm:$0xff] %v1187
          %1284 = vst [vmem:[%s213 + $0x80] sm:$0xff] %v1188
          %1285 = vst [vmem:[%s213 + $0x88] sm:$0xff] %v1189
          %1286 = vst [vmem:[%s213 + $0x90] sm:$0xff] %v1190
          %1287 = vst [vmem:[%s213 + $0x98] sm:$0xff] %v1191
          %1288 = vst [vmem:[%s213 + $0xa0] sm:$0xff] %v1192
          %1289 = vst [vmem:[%s213 + $0xa8] sm:$0xff] %v1193
          %1290 = vst [vmem:[%s213 + $0xb0] sm:$0xff] %v1194
          %1291 = vst [vmem:[%s213 + $0xb8] sm:$0xff] %v1195
          %1292 = vst [vmem:[%s213 + $0xc0] sm:$0xff] %v1196
          %1293 = vst [vmem:[%s213 + $0xc8] sm:$0xff] %v1197
          %1294 = vst [vmem:[%s213 + $0xd0] sm:$0xff] %v1198
          %1295 = vst [vmem:[%s213 + $0xd8] sm:$0xff] %v1199
          %1296 = vst [vmem:[%s213 + $0xe0] sm:$0xff] %v1200
          %1297 = vst [vmem:[%s213 + $0xe8] sm:$0xff] %v1201
          %1298 = vst [vmem:[%s213 + $0xf0] sm:$0xff] %v1202
          %1299 = vst [vmem:[%s213 + $0xf8] sm:$0xff] %v1203
          %1300 = vst [vmem:[%s213 + $0x100] sm:$0xff] %v1204
          %1301 = vst [vmem:[%s213 + $0x108] sm:$0xff] %v1205
          %1302 = vst [vmem:[%s213 + $0x110] sm:$0xff] %v1206
          %1303 = vst [vmem:[%s213 + $0x118] sm:$0xff] %v1207
          %1304 = vst [vmem:[%s213 + $0x120] sm:$0xff] %v1208
          %1305 = vst [vmem:[%s213 + $0x128] sm:$0xff] %v1209
          %1306 = vst [vmem:[%s213 + $0x130] sm:$0xff] %v1210
          %1307 = vst [vmem:[%s213 + $0x138] sm:$0xff] %v1211
          %1308 = vst [vmem:[%s213 + $0x140] sm:$0xff] %v1212
          %1309 = vst [vmem:[%s213 + $0x148] sm:$0xff] %v1213
          %1310 = vst [vmem:[%s213 + $0x150] sm:$0xff] %v1214
          %1311 = vst [vmem:[%s213 + $0x158] sm:$0xff] %v1215
          %1312 = vst [vmem:[%s213 + $0x160] sm:$0xff] %v1216
          %1313 = vst [vmem:[%s213 + $0x168] sm:$0xff] %v1217
          %1314 = vst [vmem:[%s213 + $0x170] sm:$0xff] %v1218
          %1315 = vst [vmem:[%s213 + $0x178] sm:$0xff] %v1219
          %1316 = vst [vmem:[%s213 + $0x180] sm:$0xff] %v1220
          %1317 = vst [vmem:[%s213 + $0x188] sm:$0xff] %v1221
          %1318 = vst [vmem:[%s213 + $0x190] sm:$0xff] %v1222
          %1319 = vst [vmem:[%s213 + $0x198] sm:$0xff] %v1223
          %1320 = vst [vmem:[%s213 + $0x1a0] sm:$0xff] %v1224
          %1321 = vst [vmem:[%s213 + $0x1a8] sm:$0xff] %v1225
          %1322 = vst [vmem:[%s213 + $0x1b0] sm:$0xff] %v1226
          %1323 = vst [vmem:[%s213 + $0x1b8] sm:$0xff] %v1227
          %1324 = vst [vmem:[%s213 + $0x1c0] sm:$0xff] %v1228
          %1325 = vst [vmem:[%s213 + $0x1c8] sm:$0xff] %v1229
          %1326 = vst [vmem:[%s213 + $0x1d0] sm:$0xff] %v1230
          %1327 = vst [vmem:[%s213 + $0x1d8] sm:$0xff] %v1231
          %1328 = vst [vmem:[%s213 + $0x1e0] sm:$0xff] %v1232
          %1329 = vst [vmem:[%s213 + $0x1e8] sm:$0xff] %v1233
          %1330 = vst [vmem:[%s213 + $0x1f0] sm:$0xff] %v1234
          %1331 = vst [vmem:[%s213 + $0x1f8] sm:$0xff] %v1235
          %1332 = vst [vmem:[%s213 + $0x200] sm:$0xff] %v1236
          %1333 = vst [vmem:[%s213 + $0x208] sm:$0xff] %v1237
          %1334 = vst [vmem:[%s213 + $0x210] sm:$0xff] %v1238
          %1335 = vst [vmem:[%s213 + $0x218] sm:$0xff] %v1239
          %1336 = vst [vmem:[%s213 + $0x220] sm:$0xff] %v1240
          %1337 = vst [vmem:[%s213 + $0x228] sm:$0xff] %v1241
          %1338 = vst [vmem:[%s213 + $0x230] sm:$0xff] %v1242
          %1339 = vst [vmem:[%s213 + $0x238] sm:$0xff] %v1243
          %1340 = vst [vmem:[%s213 + $0x240] sm:$0xff] %v1244
          %1341 = vst [vmem:[%s213 + $0x248] sm:$0xff] %v1245
          %1342 = vst [vmem:[%s213 + $0x250] sm:$0xff] %v1246
          %1343 = vst [vmem:[%s213 + $0x258] sm:$0xff] %v1247
          %1344 = vst [vmem:[%s213 + $0x260] sm:$0xff] %v1248
          %1345 = vst [vmem:[%s213 + $0x268] sm:$0xff] %v1249
          %1346 = vst [vmem:[%s213 + $0x270] sm:$0xff] %v1250
          %1347 = vst [vmem:[%s213 + $0x278] sm:$0xff] %v1251
          %1348 = vst [vmem:[%s213 + $0x280] sm:$0xff] %v1252
          %1349 = vst [vmem:[%s213 + $0x288] sm:$0xff] %v1253
          %1350 = vst [vmem:[%s213 + $0x290] sm:$0xff] %v1254
          %1351 = vst [vmem:[%s213 + $0x298] sm:$0xff] %v1255
          %1352 = vst [vmem:[%s213 + $0x2a0] sm:$0xff] %v1256
          %1353 = vst [vmem:[%s213 + $0x2a8] sm:$0xff] %v1257
          %1354 = vst [vmem:[%s213 + $0x2b0] sm:$0xff] %v1258
          %1355 = vst [vmem:[%s213 + $0x2b8] sm:$0xff] %v1259
          %1356 = vst [vmem:[%s213 + $0x2c0] sm:$0xff] %v1260
          %1357 = vst [vmem:[%s213 + $0x2c8] sm:$0xff] %v1261
          %1358 = vst [vmem:[%s213 + $0x2d0] sm:$0xff] %v1262
          %1359 = vst [vmem:[%s213 + $0x2d8] sm:$0xff] %v1263
          %1360 = vst [vmem:[%s213 + $0x2e0] sm:$0xff] %v1264
          %1361 = vst [vmem:[%s213 + $0x2e8] sm:$0xff] %v1265
          %1362 = vst [vmem:[%s213 + $0x2f0] sm:$0xff] %v1266
          %1363 = vst [vmem:[%s213 + $0x2f8] sm:$0xff] %v1267
        $region44: #{tpu_custom_call.1} parent=27 // pred_fallthru
          _
        %s1364 = sand.u32 %s105, 1
        %s1365 = scalar_lea.sflag [#allocation5], %s1364
        %s1366 = sand.u32 %s105, 1
        %s1367 = smul.addr %s1366, 768
        %s1368 = scalar_lea.vmem [#allocation8], %s1367
        // Predicated region
        $region45: #{tpu_custom_call.1} parent=27 // pred_check
          %p1369 = pneg %p115
        $region46: #{tpu_custom_call.1} parent=27 // pred_check_branch
          %1371 = sbr.rel (%p1369) target = $region48
        $region47: #{tpu_custom_call.1} parent=27 // pred_region
          %s1372 = smul.u32 32, %s25
          %s1373 = smul.u32 3, %s26
          %s1375 = ssub.s32 12288, 12288
          %1376 = vsyncadd %s1365, %s1375
          %s1377 = smul.addr %s1372, 3
          %s1378 = sadd.s32 %s1373, %s1377
          %s1379 = smul.addr %s1378, 128
          %s1380 = scalar_lea.hbm %s2, %s1379
          %s1381 = sshll.u32 %s1368, 4
          %s1382 = int_to_ptr.vmem [resolvable:$true] %s1381
          %1387 = dma.vmem_to_hbm [thread:$0]  %s1382, 12288, %s1380, %s1365, 384, 384, 24
        $region48: #{tpu_custom_call.1} parent=27 // pred_fallthru
          _
      $region28: #{tpu_custom_call.1} parent=5 // pred_fallthru
        _
      %p1388 = scmp.le.s32.totalorder 2, %s15
      // Predicated region
      $region49: #{tpu_custom_call.1} parent=5 // pred_check
        %p1389 = pneg %p1388
      $region50: #{tpu_custom_call.1} parent=5 // pred_check_branch
        %1391 = sbr.rel (%p1389) target = $region52
      $region51: #{tpu_custom_call.1} parent=5 // pred_region
        %s1392 = ssub.s32 %s15, 2
        // Predicated region
        $region53: #{tpu_custom_call.1} parent=51 // pred_check
          %p1393 = pneg %p121
        $region54: #{tpu_custom_call.1} parent=51 // pred_check_branch
          %1395 = sbr.rel (%p1393) target = $region56
        $region55: #{tpu_custom_call.1} parent=51 // pred_region
          %s1396 = sand.u32 %s106, 1
          %s1397 = scalar_lea.sflag [#allocation5], %s1396
          %s1398 = sand.u32 %s106, 1
          %s1399 = smul.addr %s1398, 768
          %s1400 = scalar_lea.vmem [#allocation8], %s1399
          %1401 = dma.done %s1397, 12288
        $region56: #{tpu_custom_call.1} parent=51 // pred_fallthru
          _
      $region52: #{tpu_custom_call.1} parent=5 // pred_fallthru
        _
    $region6: #{tpu_custom_call.1} parent=1 // loop_footer
      %s19 = sadd.s32 1, %s15
    $region7: #{tpu_custom_call.1} parent=1 // loop_footer_branch
      %14 = sbr.rel target = $region3
    $region8: #{tpu_custom_call.1} parent=1 // loop_exit
      _
    %1402 = vsyncpa [#allocation4], 1
    %s1403 = scalar_lea.sflag [#allocation4], 1
    %1404 = vsyncpa %s1403, 1
    %1405 = vsyncpa [#allocation7], 1
    %1406 = vsyncpa [#allocation5], 1
    %s1407 = scalar_lea.sflag [#allocation5], 1
    %1408 = vsyncpa %s1407, 1

</llo_original>
